<compile_context>
chip_gen: v6e
topology: v6e:2x2x1
jax: 0.10.0
libtpu: 0.0.40
codegen_flags: <defaults>
</compile_context>

<pallas_src>
import functools

import jax
import jax.numpy as jnp
from jax.experimental import pallas as pl
from jax.experimental.pallas import tpu as pltpu


def _round_up(x, m):
    return ((x + m - 1) // m) * m


def _physical_vmem_bytes():
    try:
        return int(pltpu.get_tpu_info().vmem_capacity_bytes)
    except Exception:
        return 64 * 1024 * 1024          # conservative fallback (v7x per-TensorCore)


def _choose_tk(item_dim, block_k):
    if block_k is not None:
        tk = int(block_k)
        assert item_dim % tk == 0, "block_k must divide item_dim"
        assert tk % 128 == 0 or tk == item_dim, "block_k must be a multiple of 128"
        return tk
    for cand in (512, 384, 256, 128):    # multiples of 128 (lane-aligned v blocks)
        if item_dim % cand == 0:
            return cand
    return item_dim                      # no K tiling (full-extent block)


def _vmem_estimate(isz, tb, tk, user_dim, item_dim, latent_dim, need_pref):
    """Per-grid-step VMEM footprint: K/batch-streamed inputs x2 (double-buffered);
    constant-index residents also counted x2 (default pipelining still allocates
    two buffers for them); outputs x2; plus accumulator scratch."""
    f4 = 4
    L = latent_dim
    if need_pref:
        streamed = 2 * (tb * tk + tk * (item_dim + L)) * isz     # v, [adj | W_ie]
        batch_str = 2 * (tb * user_dim) * isz                    # u
        resident = 2 * (user_dim * item_dim + item_dim * L) * isz + 4 * L * f4
        outs = 2 * (tb + tb * item_dim) * f4                     # score + user_pref
        scratch = tb * L * f4                                    # item_emb accumulator
    else:
        streamed = 2 * (tb * tk + tk * 2 * L) * isz              # v, [adj@W_ue | W_ie]
        batch_str = 2 * (tb * user_dim) * isz
        resident = 2 * (user_dim * L) * isz + 4 * L * f4
        outs = 2 * tb * f4
        scratch = tb * 2 * L * f4                                # [ue | ie] accumulator
    return streamed + batch_str + resident + outs + scratch


# --------------------------------------------------------------------------------------
# Kernels
# --------------------------------------------------------------------------------------
def _pref_kernel(item_dim, u_ref, v_ref, w_u2i_ref, w_cat_ref, w_ue_ref,
                 b_ue_ref, b_ie_ref, score_ref, pref_ref, ie_acc):
    """need_user_pref=True variant: user_pref output block doubles as accumulator."""
    k = pl.program_id(1)

    @pl.when(k == 0)
    def _init():
        # user2item part of LinearCG (W_u2i fully resident: user_dim x item_dim)
        pref_ref[...] = jnp.dot(u_ref[...], w_u2i_ref[...],
                                preferred_element_type=jnp.float32)
        ie_acc[...] = jnp.zeros_like(ie_acc)

    # one fused MXU pass over the K-slice: [v @ adj_slice | v @ W_ie_slice]
    fused = jnp.dot(v_ref[...], w_cat_ref[...],
                    preferred_element_type=jnp.float32)          # (tb, item_dim + L)
    pref_ref[...] += fused[:, :item_dim]
    ie_acc[...] += fused[:, item_dim:]

    @pl.when(k == pl.num_programs(1) - 1)
    def _finalize():
        pref = pref_ref[...]                                     # (tb, item_dim) f32
        user_emb = jnp.dot(pref.astype(w_ue_ref.dtype), w_ue_ref[...],
                           preferred_element_type=jnp.float32) + b_ue_ref[...]
        item_emb = ie_acc[...] + b_ie_ref[...]
        s = jnp.sum(user_emb * item_emb, axis=1)                 # (tb,)
        score_ref[...] = s.reshape(1, -1).astype(score_ref.dtype)   # lane-dense store


def _score_kernel(latent_dim, u_ref, v_ref, wfu_ref, wf_cat_ref,
                  b_ue_ref, b_ie_ref, score_ref, acc):
    """Score-only variant with the algebraic W_ue fusion (adj @ W_ue^T precomputed)."""
    k = pl.program_id(1)

    @pl.when(k == 0)
    def _init():
        acc[...] = jnp.zeros_like(acc)

    acc[...] += jnp.dot(v_ref[...], wf_cat_ref[...],
                        preferred_element_type=jnp.float32)      # (tb, 2L)

    @pl.when(k == pl.num_programs(1) - 1)
    def _finalize():
        a = acc[...]
        user_emb = (a[:, :latent_dim]
                    + jnp.dot(u_ref[...], wfu_ref[...],
                              preferred_element_type=jnp.float32)
                    + b_ue_ref[...])
        item_emb = a[:, latent_dim:] + b_ie_ref[...]
        s = jnp.sum(user_emb * item_emb, axis=1)                 # (tb,)
        score_ref[...] = s.reshape(1, -1).astype(score_ref.dtype)   # lane-dense store


# --------------------------------------------------------------------------------------
# Parameter prep (one-time: pre-transposed (in, out) layout + fused weights)
# --------------------------------------------------------------------------------------
def prepare_params(params, compute_dtype=None):
    adj = params["adj"].astype(jnp.float32)                  # (item_dim, item_dim)
    w_u2i = params["w_u2i_t"].astype(jnp.float32)            # (user_dim, item_dim)
    w_ue = params["w_ue_t"].astype(jnp.float32)              # (item_dim, latent_dim)
    w_ie = params["w_ie_t"].astype(jnp.float32)              # (item_dim, latent_dim)
    b_ue = params["b_ue"].astype(jnp.float32).reshape(1, -1)
    b_ie = params["b_ie"].astype(jnp.float32).reshape(1, -1)
    user_dim, item_dim = w_u2i.shape
    latent_dim = w_ue.shape[1]
    cdt = jnp.dtype(params["w_ue_t"].dtype if compute_dtype is None else compute_dtype)

    return dict(
        user_dim=user_dim, item_dim=item_dim, latent_dim=latent_dim,
        compute_dtype=cdt,
        # need_user_pref=True kernel: concat [adj | W_ie^T] along the output dim
        w_u2i_t=w_u2i.astype(cdt),
        w_cat=jnp.concatenate([adj, w_ie], axis=1).astype(cdt),        # (item, item+L)
        w_ue_t=w_ue.astype(cdt),
        # score-only kernel: algebraic W_ue fusion (slight rounding-order change)
        wf_u=(w_u2i @ w_ue).astype(cdt),                               # (user, L)
        wf_cat=jnp.concatenate([adj @ w_ue, w_ie], axis=1).astype(cdt),  # (item, 2L)
        # biases stay f32 (added to f32 accumulators in finalize)
        b_ue=b_ue, b_ie=b_ie,
    )


# --------------------------------------------------------------------------------------
# Forward wrapper
# --------------------------------------------------------------------------------------
def causpref_forward(user_samples, item_samples, prep, need_user_pref=False,
                     *, block_b=None, block_k=None):
    B, user_dim = user_samples.shape
    B2, item_dim = item_samples.shape
    assert B == B2
    assert user_dim == prep["user_dim"] and item_dim == prep["item_dim"]
    L = prep["latent_dim"]
    cdt = prep["compute_dtype"]
    isz = jnp.dtype(cdt).itemsize

    phys_vmem = _physical_vmem_bytes()
    budget = phys_vmem - (8 << 20)

    # ---- K tile over item_dim (contraction for adj / W_ie) ----
    tk = _choose_tk(item_dim, block_k)

    # ---- batch tile ----
    # lane-dense score store => tb is a multiple of 128, or a single full-extent tile.
    if block_b is not None:
        tb = min(int(block_b), B)
        assert tb == B or tb % 128 == 0, \
            "block_b must be a multiple of 128 (or >= batch size)"
    elif B <= 128:
        tb = B                                    # single full-extent tile, no padding
    else:
        nb128 = _round_up(B, 128) // 128
        tb = 128 * max(1, min(4, nb128 // 2))     # >=2 tiles when B>128 (v7x megacore)
        # shrink (tb, tk) until the double-buffered footprint fits physical VMEM
        if block_k is not None:
            tk_cands = [tk]
        else:
            tk_cands = sorted({c for c in (512, 384, 256, 128, item_dim)
                               if item_dim % c == 0}, reverse=True)
        found = False
        for tb_try in range(tb, 127, -128):
            for tk_try in tk_cands:
                if _vmem_estimate(isz, tb_try, tk_try, user_dim, item_dim, L,
                                  need_user_pref) <= budget:
                    tb, tk, found = tb_try, tk_try, True
                    break
            if found:
                break
        if not found:                             # smallest tiles; rely on the limit clamp
            tb, tk = 128, tk_cands[-1]

    nb = (B + tb - 1) // tb
    assert item_dim % tk == 0
    nk = item_dim // tk

    est = _vmem_estimate(isz, tb, tk, user_dim, item_dim, L, need_user_pref)
    vmem_limit = int(min(phys_vmem - (4 << 20),
                         max(32 << 20, est + est // 4 + (2 << 20))))

    u = user_samples.astype(cdt)
    v = item_samples.astype(cdt)

    score_shape = jax.ShapeDtypeStruct((1, B), jnp.float32)
    score_spec = pl.BlockSpec((1, tb), lambda i, k: (0, i))        # lane-dense block

    if need_user_pref:
        kernel = functools.partial(_pref_kernel, item_dim)
        operands = (u, v, prep["w_u2i_t"], prep["w_cat"], prep["w_ue_t"],
                    prep["b_ue"], prep["b_ie"])
        in_specs = [
            pl.BlockSpec((tb, user_dim), lambda i, k: (i, 0)),             # u
            pl.BlockSpec((tb, tk), lambda i, k: (i, k)),                   # v (K stream)
            pl.BlockSpec((user_dim, item_dim), lambda i, k: (0, 0)),       # W_u2i (res.)
            pl.BlockSpec((tk, item_dim + L), lambda i, k: (k, 0)),         # [adj | W_ie]
            pl.BlockSpec((item_dim, L), lambda i, k: (0, 0)),              # W_ue (res.)
            pl.BlockSpec((1, L), lambda i, k: (0, 0)),                     # b_ue
            pl.BlockSpec((1, L), lambda i, k: (0, 0)),                     # b_ie
        ]
        out_shape = (score_shape,
                     jax.ShapeDtypeStruct((B, item_dim), jnp.float32))
        out_specs = (score_spec,
                     pl.BlockSpec((tb, item_dim), lambda i, k: (i, 0)))
        scratch_shapes = [pltpu.VMEM((tb, L), jnp.float32)]                # item_emb acc
    else:
        kernel = functools.partial(_score_kernel, L)
        operands = (u, v, prep["wf_u"], prep["wf_cat"], prep["b_ue"], prep["b_ie"])
        in_specs = [
            pl.BlockSpec((tb, user_dim), lambda i, k: (i, 0)),             # u
            pl.BlockSpec((tb, tk), lambda i, k: (i, k)),                   # v (K stream)
            pl.BlockSpec((user_dim, L), lambda i, k: (0, 0)),              # W_u2i @ W_ue
            pl.BlockSpec((tk, 2 * L), lambda i, k: (k, 0)),                # [adj@W_ue|W_ie]
            pl.BlockSpec((1, L), lambda i, k: (0, 0)),                     # b_ue
            pl.BlockSpec((1, L), lambda i, k: (0, 0)),                     # b_ie
        ]
        out_shape = (score_shape,)
        out_specs = (score_spec,)
        scratch_shapes = [pltpu.VMEM((tb, 2 * L), jnp.float32)]            # [ue | ie] acc

    grid_spec = pltpu.PrefetchScalarGridSpec(
        num_scalar_prefetch=0,
        grid=(nb, nk),
        in_specs=in_specs,
        out_specs=out_specs,
        scratch_shapes=scratch_shapes,
    )

    outs = pl.pallas_call(
        kernel,
        out_shape=out_shape,
        grid_spec=grid_spec,
        compiler_params=pltpu.CompilerParams(
            dimension_semantics=("parallel", "arbitrary"),
            vmem_limit_bytes=vmem_limit,
        ),
    )(*operands)

    if need_user_pref:
        score, pref = outs
        return score[0], pref
    (score,) = outs
    return score[0]


# --------------------------------------------------------------------------------------
# Reference + synthetic init
# --------------------------------------------------------------------------------------
def init_params(key, user_dim, item_dim, latent_dim):
    """Synthetic init mirroring the torch module; weights stored pre-transposed (in, out)."""
    ks = jax.random.split(key, 6)
    adj = 0.15 * jax.random.normal(ks[0], (item_dim, item_dim), jnp.float32)

    def lin_w_t(kk, in_f, out_f):
        bound = 1.0 / (in_f ** 0.5)
        return jax.random.uniform(kk, (in_f, out_f), jnp.float32, -bound, bound)

    def lin_b(kk, in_f, out_f):
        bound = 1.0 / (in_f ** 0.5)
        return jax.random.uniform(kk, (1, out_f), jnp.float32, -bound, bound)

    return dict(
        adj=adj,
        w_u2i_t=lin_w_t(ks[1], user_dim, item_dim),
        w_ue_t=lin_w_t(ks[2], item_dim, latent_dim),
        b_ue=lin_b(ks[3], item_dim, latent_dim),
        w_ie_t=lin_w_t(ks[4], item_dim, latent_dim),
        b_ie=lin_b(ks[5], item_dim, latent_dim),
    )


def causpref_forward_ref(u, v, params):
    pref = u @ params["w_u2i_t"] + v @ params["adj"]
    ue = pref @ params["w_ue_t"] + params["b_ue"]
    ie = v @ params["w_ie_t"] + params["b_ie"]
    return jnp.sum(ue * ie, axis=1), pref


if __name__ == "__main__":
    B, USER_DIM, ITEM_DIM, LATENT_DIM = 256, 16, 256, 64

    key = jax.random.PRNGKey(0)
    kp, ku, ki = jax.random.split(key, 3)
    params = init_params(kp, USER_DIM, ITEM_DIM, LATENT_DIM)
    user_samples = jax.random.normal(ku, (B, USER_DIM), jnp.float32)
    item_samples = jax.random.normal(ki, (B, ITEM_DIM), jnp.float32)

    ref_score, ref_pref = causpref_forward_ref(user_samples, item_samples, params)

    # f32 path with user_pref output: 2 batch tiles x 2 K tiles (both grid axes + accums)
    prep = prepare_params(params)
    score, user_pref = causpref_forward(user_samples, item_samples, prep,
                                        need_user_pref=True,
                                        block_b=128, block_k=128)
    jax.block_until_ready((score, user_pref))
    assert score.shape == (B,) and user_pref.shape == (B, ITEM_DIM)
    assert jnp.allclose(score, ref_score, atol=2e-3, rtol=2e-3)
    assert jnp.allclose(user_pref, ref_pref, atol=2e-3, rtol=2e-3)

    # score-only path (algebraically fused weights; no (B, item_dim) HBM writeback)
    score_only = causpref_forward(user_samples, item_samples, prep,
                                  need_user_pref=False, block_b=128, block_k=128)
    jax.block_until_ready(score_only)
    assert jnp.allclose(score_only, ref_score, atol=2e-3, rtol=2e-3)

    # auto tile selection (VMEM-budgeted; >=2 batch tiles for v7x megacore)
    score_auto = causpref_forward(user_samples, item_samples, prep,
                                  need_user_pref=False)
    jax.block_until_ready(score_auto)
    assert jnp.allclose(score_auto, ref_score, atol=2e-3, rtol=2e-3)

    # small batch: single full-extent tile, no padding / no batch alignment required
    score_small = causpref_forward(user_samples[:48], item_samples[:48], prep,
                                   need_user_pref=False)
    jax.block_until_ready(score_small)
    assert jnp.allclose(score_small, ref_score[:48], atol=2e-3, rtol=2e-3)

    # bf16 compute / f32 accumulation path (loose check against f32 reference)
    prep_bf16 = prepare_params(params, compute_dtype=jnp.bfloat16)
    score_bf16, pref_bf16 = causpref_forward(user_samples, item_samples, prep_bf16,
                                             need_user_pref=True,
                                             block_b=128, block_k=128)
    jax.block_until_ready((score_bf16, pref_bf16))
    err = float(jnp.max(jnp.abs(score_bf16 - ref_score)))
    tol = float(0.08 * jnp.max(jnp.abs(ref_score)) + 0.1)
    assert jnp.all(jnp.isfinite(score_bf16)) and err < tol

    print("KERNEL_OK")
</pallas_src>

<mosaic_0001>
module attributes {stable_mosaic.version = 11 : i64} {
  func.func @_pref_kernel(%arg0: i32, %arg1: i32, %arg2: memref<128x16xf32, #tpu.memory_space<vmem>>, %arg3: memref<128x128xf32, #tpu.memory_space<vmem>>, %arg4: memref<16x256xf32, #tpu.memory_space<vmem>>, %arg5: memref<128x320xf32, #tpu.memory_space<vmem>>, %arg6: memref<256x64xf32, #tpu.memory_space<vmem>>, %arg7: memref<1x64xf32, #tpu.memory_space<vmem>>, %arg8: memref<1x64xf32, #tpu.memory_space<vmem>>, %arg9: memref<1x128xf32, #tpu.memory_space<vmem>>, %arg10: memref<128x256xf32, #tpu.memory_space<vmem>>, %arg11: memref<128x64xf32, #tpu.memory_space<vmem>>) attributes {dimension_semantics = [#tpu.dimension_semantics<parallel>, #tpu.dimension_semantics<arbitrary>], iteration_bounds = array<i64: 2, 2>, scalar_prefetch = 0 : i64, scratch_operands = 1 : i64, tpu.core_type = #tpu.core_type<tc>, window_params = [{transform_indices = @transform_0, window_bounds = array<i64: 128, 16>}, {transform_indices = @transform_1, window_bounds = array<i64: 128, 128>}, {pipeline_mode = #tpu.pipeline_mode<synchronous>, transform_indices = @transform_2, window_bounds = array<i64: 16, 256>}, {transform_indices = @transform_3, window_bounds = array<i64: 128, 320>}, {pipeline_mode = #tpu.pipeline_mode<synchronous>, transform_indices = @transform_4, window_bounds = array<i64: 256, 64>}, {pipeline_mode = #tpu.pipeline_mode<synchronous>, transform_indices = @transform_5, window_bounds = array<i64: 1, 64>}, {pipeline_mode = #tpu.pipeline_mode<synchronous>, transform_indices = @transform_6, window_bounds = array<i64: 1, 64>}, {transform_indices = @transform_7, window_bounds = array<i64: 1, 128>}, {transform_indices = @transform_8, window_bounds = array<i64: 128, 256>}]} {
    %c0_i32 = arith.constant 0 : i32
    %0 = arith.cmpi eq, %arg1, %c0_i32 : i32
    %1 = arith.extui %0 : i1 to i32
    %c0_i32_0 = arith.constant 0 : i32
    %2 = arith.cmpi ne, %1, %c0_i32_0 : i32
    scf.if %2 {
      %c0_13 = arith.constant 0 : index
      %c0_14 = arith.constant 0 : index
      %17 = vector.load %arg2[%c0_13, %c0_14] : memref<128x16xf32, #tpu.memory_space<vmem>>, vector<128x16xf32>
      %c0_15 = arith.constant 0 : index
      %c0_16 = arith.constant 0 : index
      %18 = vector.load %arg4[%c0_15, %c0_16] : memref<16x256xf32, #tpu.memory_space<vmem>>, vector<16x256xf32>
      %cst_17 = arith.constant dense<0.000000e+00> : vector<128x256xf32>
      %19 = tpu.matmul %17, %18, %cst_17 {dimension_numbers = #tpu.dot_dimension_numbers<[1], [0], [0], [1], [0, 0, 1, 1], [], []>} : vector<128x16xf32>, vector<16x256xf32>, vector<128x256xf32> -> vector<128x256xf32>
      %c0_18 = arith.constant 0 : index
      %c0_19 = arith.constant 0 : index
      %20 = vector.load %arg10[%c0_18, %c0_19] : memref<128x256xf32, #tpu.memory_space<vmem>>, vector<128x256xf32>
      tpu.vector_store %arg10[%c0_18, %c0_19], %19 {strides = array<i32>} : memref<128x256xf32, #tpu.memory_space<vmem>>, vector<128x256xf32>,
      %cst_20 = arith.constant 0.000000e+00 : f32
      %21 = vector.broadcast %cst_20 : f32 to vector<128x64xf32>
      %c0_21 = arith.constant 0 : index
      %c0_22 = arith.constant 0 : index
      %22 = vector.load %arg11[%c0_21, %c0_22] : memref<128x64xf32, #tpu.memory_space<vmem>>, vector<128x64xf32>
      tpu.vector_store %arg11[%c0_21, %c0_22], %21 {strides = array<i32>} : memref<128x64xf32, #tpu.memory_space<vmem>>, vector<128x64xf32>,
    } else {
    }
    %c0 = arith.constant 0 : index
    %c0_1 = arith.constant 0 : index
    %3 = vector.load %arg3[%c0, %c0_1] : memref<128x128xf32, #tpu.memory_space<vmem>>, vector<128x128xf32>
    %c0_2 = arith.constant 0 : index
    %c0_3 = arith.constant 0 : index
    %4 = vector.load %arg5[%c0_2, %c0_3] : memref<128x320xf32, #tpu.memory_space<vmem>>, vector<128x320xf32>
    %cst = arith.constant dense<0.000000e+00> : vector<128x320xf32>
    %5 = tpu.matmul %3, %4, %cst {dimension_numbers = #tpu.dot_dimension_numbers<[1], [0], [0], [1], [0, 0, 1, 1], [], []>} : vector<128x128xf32>, vector<128x320xf32>, vector<128x320xf32> -> vector<128x320xf32>
    %c0_4 = arith.constant 0 : index
    %c0_5 = arith.constant 0 : index
    %6 = vector.load %arg10[%c0_4, %c0_5] : memref<128x256xf32, #tpu.memory_space<vmem>>, vector<128x256xf32>
    %7 = vector.extract_strided_slice %5 {offsets = [0, 0], sizes = [128, 256], strides = [1, 1]} : vector<128x320xf32> to vector<128x256xf32>
    %8 = arith.addf %6, %7 : vector<128x256xf32>
    %c0_6 = arith.constant 0 : index
    %c0_7 = arith.constant 0 : index
    %9 = vector.load %arg10[%c0_6, %c0_7] : memref<128x256xf32, #tpu.memory_space<vmem>>, vector<128x256xf32>
    tpu.vector_store %arg10[%c0_6, %c0_7], %8 {strides = array<i32>} : memref<128x256xf32, #tpu.memory_space<vmem>>, vector<128x256xf32>,
    %c0_8 = arith.constant 0 : index
    %c0_9 = arith.constant 0 : index
    %10 = vector.load %arg11[%c0_8, %c0_9] : memref<128x64xf32, #tpu.memory_space<vmem>>, vector<128x64xf32>
    %11 = vector.extract_strided_slice %5 {offsets = [0, 256], sizes = [128, 64], strides = [1, 1]} : vector<128x320xf32> to vector<128x64xf32>
    %12 = arith.addf %10, %11 : vector<128x64xf32>
    %c0_10 = arith.constant 0 : index
    %c0_11 = arith.constant 0 : index
    %13 = vector.load %arg11[%c0_10, %c0_11] : memref<128x64xf32, #tpu.memory_space<vmem>>, vector<128x64xf32>
    tpu.vector_store %arg11[%c0_10, %c0_11], %12 {strides = array<i32>} : memref<128x64xf32, #tpu.memory_space<vmem>>, vector<128x64xf32>,
    %c1_i32 = arith.constant 1 : i32
    %14 = arith.cmpi eq, %arg1, %c1_i32 : i32
    %15 = arith.extui %14 : i1 to i32
    %c0_i32_12 = arith.constant 0 : i32
    %16 = arith.cmpi ne, %15, %c0_i32_12 : i32
    scf.if %16 {
      %c0_13 = arith.constant 0 : index
      %c0_14 = arith.constant 0 : index
      %17 = vector.load %arg10[%c0_13, %c0_14] : memref<128x256xf32, #tpu.memory_space<vmem>>, vector<128x256xf32>
      %c0_15 = arith.constant 0 : index
      %c0_16 = arith.constant 0 : index
      %18 = vector.load %arg6[%c0_15, %c0_16] : memref<256x64xf32, #tpu.memory_space<vmem>>, vector<256x64xf32>
      %cst_17 = arith.constant dense<0.000000e+00> : vector<128x64xf32>
      %19 = tpu.matmul %17, %18, %cst_17 {dimension_numbers = #tpu.dot_dimension_numbers<[1], [0], [0], [1], [0, 0, 1, 1], [], []>} : vector<128x256xf32>, vector<256x64xf32>, vector<128x64xf32> -> vector<128x64xf32>
      %c0_18 = arith.constant 0 : index
      %c0_19 = arith.constant 0 : index
      %20 = vector.load %arg7[%c0_18, %c0_19] : memref<1x64xf32, #tpu.memory_space<vmem>>, vector<1x64xf32>
      %21 = vector.broadcast %20 : vector<1x64xf32> to vector<128x64xf32>
      %22 = arith.addf %19, %21 : vector<128x64xf32>
      %c0_20 = arith.constant 0 : index
      %c0_21 = arith.constant 0 : index
      %23 = vector.load %arg11[%c0_20, %c0_21] : memref<128x64xf32, #tpu.memory_space<vmem>>, vector<128x64xf32>
      %c0_22 = arith.constant 0 : index
      %c0_23 = arith.constant 0 : index
      %24 = vector.load %arg8[%c0_22, %c0_23] : memref<1x64xf32, #tpu.memory_space<vmem>>, vector<1x64xf32>
      %25 = vector.broadcast %24 : vector<1x64xf32> to vector<128x64xf32>
      %26 = arith.addf %23, %25 : vector<128x64xf32>
      %27 = arith.mulf %22, %26 : vector<128x64xf32>
      %cst_24 = arith.constant dense<0.000000e+00> : vector<128xf32>
      %28 = vector.multi_reduction <add>, %27, %cst_24 [1] : vector<128x64xf32> to vector<128xf32>
      %29 = vector.shape_cast %28 : vector<128xf32> to vector<1x128xf32>
      %c0_25 = arith.constant 0 : index
      %c0_26 = arith.constant 0 : index
      %30 = vector.load %arg9[%c0_25, %c0_26] : memref<1x128xf32, #tpu.memory_space<vmem>>, vector<1x128xf32>
      tpu.vector_store %arg9[%c0_25, %c0_26], %29 {strides = array<i32>} : memref<1x128xf32, #tpu.memory_space<vmem>>, vector<1x128xf32>,
    } else {
    }
    return
  }
  func.func @transform_0(%arg0: i32, %arg1: i32) -> (i32, i32) {
    %c0_i32 = arith.constant 0 : i32
    %c0_i32_0 = arith.constant 0 : i32
    return %arg0, %c0_i32 : i32, i32
  }
  func.func @transform_1(%arg0: i32, %arg1: i32) -> (i32, i32) {
    %c0_i32 = arith.constant 0 : i32
    return %arg0, %arg1 : i32, i32
  }
  func.func @transform_2(%arg0: i32, %arg1: i32) -> (i32, i32) {
    %c0_i32 = arith.constant 0 : i32
    %c0_i32_0 = arith.constant 0 : i32
    %c0_i32_1 = arith.constant 0 : i32
    return %c0_i32, %c0_i32_0 : i32, i32
  }
  func.func @transform_3(%arg0: i32, %arg1: i32) -> (i32, i32) {
    %c0_i32 = arith.constant 0 : i32
    %c0_i32_0 = arith.constant 0 : i32
    return %arg1, %c0_i32 : i32, i32
  }
  func.func @transform_4(%arg0: i32, %arg1: i32) -> (i32, i32) {
    %c0_i32 = arith.constant 0 : i32
    %c0_i32_0 = arith.constant 0 : i32
    %c0_i32_1 = arith.constant 0 : i32
    return %c0_i32, %c0_i32_0 : i32, i32
  }
  func.func @transform_5(%arg0: i32, %arg1: i32) -> (i32, i32) {
    %c0_i32 = arith.constant 0 : i32
    %c0_i32_0 = arith.constant 0 : i32
    %c0_i32_1 = arith.constant 0 : i32
    return %c0_i32, %c0_i32_0 : i32, i32
  }
  func.func @transform_6(%arg0: i32, %arg1: i32) -> (i32, i32) {
    %c0_i32 = arith.constant 0 : i32
    %c0_i32_0 = arith.constant 0 : i32
    %c0_i32_1 = arith.constant 0 : i32
    return %c0_i32, %c0_i32_0 : i32, i32
  }
  func.func @transform_7(%arg0: i32, %arg1: i32) -> (i32, i32) {
    %c0_i32 = arith.constant 0 : i32
    %c0_i32_0 = arith.constant 0 : i32
    return %c0_i32, %arg0 : i32, i32
  }
  func.func @transform_8(%arg0: i32, %arg1: i32) -> (i32, i32) {
    %c0_i32 = arith.constant 0 : i32
    %c0_i32_0 = arith.constant 0 : i32
    return %arg0, %c0_i32 : i32, i32
  }
}

</mosaic_0001>

<llo_original>
// kernel: tpu_custom_call.1
$region0: #{tpu_custom_call.1}
  #allocation0 [shape = 'u32[]', space=smem, size = 0x4, offset = 0x4, fixed_abs, tag = 'smem constant byte address 0x4 - core index']
  #allocation1 [shape = 'u32[144,128]{1,0:T(1,128)}', space=vmem, size = 0x12000, scoped, tag = 'internal scratch']
  #allocation2 [shape = 'f32[128,64]{1,0:T(8,128)}', space=vmem, size = 0x10000, scoped, tag = 'scratch operand']
  %s0 = inlined_call_operand.vmem [shape: f32[256,16], index: 0, kind: input, shape index: {}]
  %s1 = inlined_call_operand.vmem [shape: f32[256,256], index: 1, kind: input, shape index: {}]
  %s2 = inlined_call_operand.vmem [shape: f32[16,256], index: 2, kind: input, shape index: {}]
  %s3 = inlined_call_operand.vmem [shape: f32[256,320], index: 3, kind: input, shape index: {}]
  %s4 = inlined_call_operand.vmem [shape: f32[256,64], index: 4, kind: input, shape index: {}]
  %s5 = inlined_call_operand.vmem [shape: f32[1,64], index: 5, kind: input, shape index: {}]
  %s6 = inlined_call_operand.vmem [shape: f32[1,64], index: 6, kind: input, shape index: {}]
  %s7 = inlined_call_operand.hbm [shape: f32[1,256], index: 7, kind: output, shape index: {0}]
  %s8 = inlined_call_operand.hbm [shape: f32[256,256], index: 8, kind: output, shape index: {1}]
  %9 = xla_tuple %s7, %s8
  %s10 = sld [smem:[#allocation0]]
  $region115: #{tpu_custom_call.1} parent=0
    _
  %s12 = ssub.s32 1, %s10
  %s13 = scalar_select 0, %s12, %s10
  $region1: #{tpu_custom_call.1} parent=0
    #allocation3 [shape = 'u8[131072]{0}', space=vmem, size = 0x20000, scoped, tag = 'input window, operand 1']
    #allocation4 [shape = 'u8[1024]{0}', space=vmem, size = 0x400, scoped, tag = 'output window, operand 0']
    #allocation5 [shape = 's32[2]{0}', space=sflag, size = 0x8, scoped, tag = 'scoped memory for tpu_custom_call.1']
    #allocation6 [shape = 'u8[262144]{0}', space=vmem, size = 0x40000, scoped, tag = 'output window, operand 1']
    #allocation7 [shape = 's32[2]{0}', space=sflag, size = 0x8, scoped, tag = 'scoped memory for tpu_custom_call.1']
    %14 = vsyncpa [#allocation5], 0
    %s15 = scalar_lea.sflag [#allocation5], 1
    %16 = vsyncpa %s15, 0
    %17 = vsyncpa [#allocation7], 0
    %s18 = scalar_lea.sflag [#allocation7], 1
    %19 = vsyncpa %s18, 0
    loop: start=0, step=1, limit=6
    $region2: #{tpu_custom_call.1} parent=1 // loop_pre_header
      _
    $region3: #{tpu_custom_call.1} parent=1 // loop_header
      %s21 = sphi 0, %s25
      %p22 = scmp.ge.s32.totalorder %s21, 6
      %s28 = sphi 0, %s40
      %s29 = sphi 0, %s36
      %s30 = sphi 0, %s28
      %s31 = sphi 0, %s29
      %s32 = sphi 0, %s30
      %s33 = sphi 0, %s31
      %s43 = sphi 0, %s45
      %s46 = sphi 0, %s43
      %s47 = sphi 0, %s46
      %s63 = sphi 0, %s47
      %s71 = sphi 0, %s73
      %s74 = sphi 0, %s71
      %s75 = sphi 0, %s74
      %s91 = sphi 0, %s75
      %s95 = sphi 0, %s95
      %s97 = sphi 0, %s95
      %s98 = sphi 0, %s97
      %s112 = sphi 0, %s98
      %s118 = sphi 0, %s120
      %s121 = sphi 0, %s118
      %s122 = sphi 0, %s121
      %s138 = sphi 0, %s122
      %s142 = sphi 0, %s142
      %s144 = sphi 0, %s142
      %s145 = sphi 0, %s144
      %s159 = sphi 0, %s145
      %s163 = sphi 0, %s163
      %s165 = sphi 0, %s163
      %s166 = sphi 0, %s165
      %s180 = sphi 0, %s166
      %s184 = sphi 0, %s184
      %s186 = sphi 0, %s184
      %s187 = sphi 0, %s186
      %s201 = sphi 0, %s187
      %s207 = sphi 0, %s209
      %s210 = sphi 0, %s207
      %s211 = sphi 0, %s210
      %s227 = sphi 0, %s211
      %s233 = sphi 0, %s235
      %s236 = sphi 0, %s233
      %s237 = sphi 0, %s236
      %s253 = sphi 0, %s237
    $region4: #{tpu_custom_call.1} parent=1 // loop_header_branch
      %24 = sbr.rel (%p22) target = $region8
    $region5: #{tpu_custom_call.1} parent=1 // loop_body
      %s26 = ssub.s32 %s21, 1
      %s27 = ssub.s32 %s21, 2
      %s34 = sadd.s32 1, %s29
      %p35 = scmp.ge.s32.totalorder %s34, 2
      %s36 = scalar_select %p35, 0, %s34
      %s37 = sadd.s32 1, %s28
      %s38 = scalar_select %p35, %s37, %s28
      %p39 = scmp.ge.s32.totalorder %s38, 2
      %s40 = scalar_select %p39, 0, %s38
      %s41 = ssub.s32 %s28, %s40
      %p42 = scmp.eq.s32.totalorder %s41, 0
      %s44 = sadd.s32 %s43, 1
      %s45 = scalar_select %p42, %s43, %s44
      %p48 = pneg %p42
      %p49 = scmp.eq.s32.totalorder %s21, 3
      %p50 = por %p48, %p49
      %p51 = scmp.ne.s32.totalorder %s43, %s46
      %p52 = scmp.eq.s32.totalorder %s21, 0
      %p53 = por %p51, %p52
      %p54 = scmp.ne.s32.totalorder %s43, %s46
      %p55 = scmp.eq.s32.totalorder %s26, 3
      %p56 = por %p54, %p55
      %p57 = scmp.ne.s32.totalorder %s46, %s47
      %p58 = scmp.eq.s32.totalorder %s26, 0
      %p59 = por %p57, %p58
      %p60 = scmp.ne.s32.totalorder %s46, %s47
      %p61 = scmp.eq.s32.totalorder %s27, 3
      %p62 = por %p60, %p61
      %p64 = scmp.ne.s32.totalorder %s47, %s63
      %p65 = scmp.eq.s32.totalorder %s27, 0
      %p66 = por %p64, %p65
      %s67 = ssub.s32 %s28, %s40
      %s68 = ssub.s32 %s29, %s36
      %s69 = sor.u32 %s67, %s68
      %p70 = scmp.eq.s32.totalorder %s69, 0
      %s72 = sadd.s32 %s71, 1
      %s73 = scalar_select %p70, %s71, %s72
      %p76 = pneg %p70
      %p77 = scmp.eq.s32.totalorder %s21, 3
      %p78 = por %p76, %p77
      %p79 = scmp.ne.s32.totalorder %s71, %s74
      %p80 = scmp.eq.s32.totalorder %s21, 0
      %p81 = por %p79, %p80
      %p82 = scmp.ne.s32.totalorder %s71, %s74
      %p83 = scmp.eq.s32.totalorder %s26, 3
      %p84 = por %p82, %p83
      %p85 = scmp.ne.s32.totalorder %s74, %s75
      %p86 = scmp.eq.s32.totalorder %s26, 0
      %p87 = por %p85, %p86
      %p88 = scmp.ne.s32.totalorder %s74, %s75
      %p89 = scmp.eq.s32.totalorder %s27, 3
      %p90 = por %p88, %p89
      %p92 = scmp.ne.s32.totalorder %s75, %s91
      %p93 = scmp.eq.s32.totalorder %s27, 0
      %p94 = por %p92, %p93
      %s96 = sadd.s32 %s95, 1
      %p99 = scmp.eq.s32.totalorder %s21, 3
      %p100 = scmp.ne.s32.totalorder %s95, %s97
      %p101 = scmp.eq.s32.totalorder %s21, 0
      %p102 = por %p100, %p101
      %p103 = scmp.ne.s32.totalorder %s95, %s97
      %p104 = scmp.eq.s32.totalorder %s26, 3
      %p105 = por %p103, %p104
      %p106 = scmp.ne.s32.totalorder %s97, %s98
      %p107 = scmp.eq.s32.totalorder %s26, 0
      %p108 = por %p106, %p107
      %p109 = scmp.ne.s32.totalorder %s97, %s98
      %p110 = scmp.eq.s32.totalorder %s27, 3
      %p111 = por %p109, %p110
      %p113 = scmp.ne.s32.totalorder %s98, %s112
      %p114 = scmp.eq.s32.totalorder %s27, 0
      %p115 = por %p113, %p114
      %s116 = ssub.s32 %s29, %s36
      %p117 = scmp.eq.s32.totalorder %s116, 0
      %s119 = sadd.s32 %s118, 1
      %s120 = scalar_select %p117, %s118, %s119
      %p123 = pneg %p117
      %p124 = scmp.eq.s32.totalorder %s21, 3
      %p125 = por %p123, %p124
      %p126 = scmp.ne.s32.totalorder %s118, %s121
      %p127 = scmp.eq.s32.totalorder %s21, 0
      %p128 = por %p126, %p127
      %p129 = scmp.ne.s32.totalorder %s118, %s121
      %p130 = scmp.eq.s32.totalorder %s26, 3
      %p131 = por %p129, %p130
      %p132 = scmp.ne.s32.totalorder %s121, %s122
      %p133 = scmp.eq.s32.totalorder %s26, 0
      %p134 = por %p132, %p133
      %p135 = scmp.ne.s32.totalorder %s121, %s122
      %p136 = scmp.eq.s32.totalorder %s27, 3
      %p137 = por %p135, %p136
      %p139 = scmp.ne.s32.totalorder %s122, %s138
      %p140 = scmp.eq.s32.totalorder %s27, 0
      %p141 = por %p139, %p140
      %s143 = sadd.s32 %s142, 1
      %p146 = scmp.eq.s32.totalorder %s21, 3
      %p147 = scmp.ne.s32.totalorder %s142, %s144
      %p148 = scmp.eq.s32.totalorder %s21, 0
      %p149 = por %p147, %p148
      %p150 = scmp.ne.s32.totalorder %s142, %s144
      %p151 = scmp.eq.s32.totalorder %s26, 3
      %p152 = por %p150, %p151
      %p153 = scmp.ne.s32.totalorder %s144, %s145
      %p154 = scmp.eq.s32.totalorder %s26, 0
      %p155 = por %p153, %p154
      %p156 = scmp.ne.s32.totalorder %s144, %s145
      %p157 = scmp.eq.s32.totalorder %s27, 3
      %p158 = por %p156, %p157
      %p160 = scmp.ne.s32.totalorder %s145, %s159
      %p161 = scmp.eq.s32.totalorder %s27, 0
      %p162 = por %p160, %p161
      %s164 = sadd.s32 %s163, 1
      %p167 = scmp.eq.s32.totalorder %s21, 3
      %p168 = scmp.ne.s32.totalorder %s163, %s165
      %p169 = scmp.eq.s32.totalorder %s21, 0
      %p170 = por %p168, %p169
      %p171 = scmp.ne.s32.totalorder %s163, %s165
      %p172 = scmp.eq.s32.totalorder %s26, 3
      %p173 = por %p171, %p172
      %p174 = scmp.ne.s32.totalorder %s165, %s166
      %p175 = scmp.eq.s32.totalorder %s26, 0
      %p176 = por %p174, %p175
      %p177 = scmp.ne.s32.totalorder %s165, %s166
      %p178 = scmp.eq.s32.totalorder %s27, 3
      %p179 = por %p177, %p178
      %p181 = scmp.ne.s32.totalorder %s166, %s180
      %p182 = scmp.eq.s32.totalorder %s27, 0
      %p183 = por %p181, %p182
      %s185 = sadd.s32 %s184, 1
      %p188 = scmp.eq.s32.totalorder %s21, 3
      %p189 = scmp.ne.s32.totalorder %s184, %s186
      %p190 = scmp.eq.s32.totalorder %s21, 0
      %p191 = por %p189, %p190
      %p192 = scmp.ne.s32.totalorder %s184, %s186
      %p193 = scmp.eq.s32.totalorder %s26, 3
      %p194 = por %p192, %p193
      %p195 = scmp.ne.s32.totalorder %s186, %s187
      %p196 = scmp.eq.s32.totalorder %s26, 0
      %p197 = por %p195, %p196
      %p198 = scmp.ne.s32.totalorder %s186, %s187
      %p199 = scmp.eq.s32.totalorder %s27, 3
      %p200 = por %p198, %p199
      %p202 = scmp.ne.s32.totalorder %s187, %s201
      %p203 = scmp.eq.s32.totalorder %s27, 0
      %p204 = por %p202, %p203
      %s205 = ssub.s32 %s28, %s40
      %p206 = scmp.eq.s32.totalorder %s205, 0
      %s208 = sadd.s32 %s207, 1
      %s209 = scalar_select %p206, %s207, %s208
      %p212 = pneg %p206
      %p213 = scmp.eq.s32.totalorder %s21, 3
      %p214 = por %p212, %p213
      %p215 = scmp.ne.s32.totalorder %s207, %s210
      %p216 = scmp.eq.s32.totalorder %s21, 0
      %p217 = por %p215, %p216
      %p218 = scmp.ne.s32.totalorder %s207, %s210
      %p219 = scmp.eq.s32.totalorder %s26, 3
      %p220 = por %p218, %p219
      %p221 = scmp.ne.s32.totalorder %s210, %s211
      %p222 = scmp.eq.s32.totalorder %s26, 0
      %p223 = por %p221, %p222
      %p224 = scmp.ne.s32.totalorder %s210, %s211
      %p225 = scmp.eq.s32.totalorder %s27, 3
      %p226 = por %p224, %p225
      %p228 = scmp.ne.s32.totalorder %s211, %s227
      %p229 = scmp.eq.s32.totalorder %s27, 0
      %p230 = por %p228, %p229
      %s231 = ssub.s32 %s28, %s40
      %p232 = scmp.eq.s32.totalorder %s231, 0
      %s234 = sadd.s32 %s233, 1
      %s235 = scalar_select %p232, %s233, %s234
      %p238 = pneg %p232
      %p239 = scmp.eq.s32.totalorder %s21, 3
      %p240 = por %p238, %p239
      %p241 = scmp.ne.s32.totalorder %s233, %s236
      %p242 = scmp.eq.s32.totalorder %s21, 0
      %p243 = por %p241, %p242
      %p244 = scmp.ne.s32.totalorder %s233, %s236
      %p245 = scmp.eq.s32.totalorder %s26, 3
      %p246 = por %p244, %p245
      %p247 = scmp.ne.s32.totalorder %s236, %s237
      %p248 = scmp.eq.s32.totalorder %s26, 0
      %p249 = por %p247, %p248
      %p250 = scmp.ne.s32.totalorder %s236, %s237
      %p251 = scmp.eq.s32.totalorder %s27, 3
      %p252 = por %p250, %p251
      %p254 = scmp.ne.s32.totalorder %s237, %s253
      %p255 = scmp.eq.s32.totalorder %s27, 0
      %p256 = por %p254, %p255
      %p257 = scmp.le.s32.totalorder 1, %s21
      %p258 = scmp.lt.s32.totalorder %s21, 5
      %p259 = pnand %p257, %p258
      %p260 = pneg %p259
      // Predicated region
      $region9: #{tpu_custom_call.1} parent=5 // pred_check
        _
      $region10: #{tpu_custom_call.1} parent=5 // pred_check_branch
        %262 = sbr.rel (%p259) target = $region12
      $region11: #{tpu_custom_call.1} parent=5 // pred_region
        %s263 = ssub.s32 %s21, 1
        // Predicated region
        $region13: #{tpu_custom_call.1} parent=11 // pred_check
          %p264 = pneg %p108
        $region14: #{tpu_custom_call.1} parent=11 // pred_check_branch
          %266 = sbr.rel (%p264) target = $region16
        $region15: #{tpu_custom_call.1} parent=11 // pred_region
          _
        $region16: #{tpu_custom_call.1} parent=11 // pred_fallthru
          _
        // Predicated region
        $region17: #{tpu_custom_call.1} parent=11 // pred_check
          %p267 = pneg %p155
        $region18: #{tpu_custom_call.1} parent=11 // pred_check_branch
          %269 = sbr.rel (%p267) target = $region20
        $region19: #{tpu_custom_call.1} parent=11 // pred_region
          _
        $region20: #{tpu_custom_call.1} parent=11 // pred_fallthru
          _
        // Predicated region
        $region21: #{tpu_custom_call.1} parent=11 // pred_check
          %p270 = pneg %p176
        $region22: #{tpu_custom_call.1} parent=11 // pred_check_branch
          %272 = sbr.rel (%p270) target = $region24
        $region23: #{tpu_custom_call.1} parent=11 // pred_region
          _
        $region24: #{tpu_custom_call.1} parent=11 // pred_fallthru
          _
        // Predicated region
        $region25: #{tpu_custom_call.1} parent=11 // pred_check
          %p273 = pneg %p197
        $region26: #{tpu_custom_call.1} parent=11 // pred_check_branch
          %275 = sbr.rel (%p273) target = $region28
        $region27: #{tpu_custom_call.1} parent=11 // pred_region
          _
        $region28: #{tpu_custom_call.1} parent=11 // pred_fallthru
          _
      $region12: #{tpu_custom_call.1} parent=5 // pred_fallthru
        _
      %p276 = scmp.lt.s32.totalorder %s21, 4
      // Predicated region
      $region29: #{tpu_custom_call.1} parent=5 // pred_check
        %p277 = pneg %p276
      $region30: #{tpu_custom_call.1} parent=5 // pred_check_branch
        %279 = sbr.rel (%p277) target = $region32
      $region31: #{tpu_custom_call.1} parent=5 // pred_region
        // Predicated region
        $region33: #{tpu_custom_call.1} parent=31 // pred_check
          %p280 = pneg %p53
        $region34: #{tpu_custom_call.1} parent=31 // pred_check_branch
          %282 = sbr.rel (%p280) target = $region36
        $region35: #{tpu_custom_call.1} parent=31 // pred_region
          %s283 = smul.u32 16, %s28
          %p284 = scmp.lt.s32.totalorder %s283, 31
          %s285 = scalar_select %p284, %s283, 31
          %s286 = smul.addr %s285, 8
          %s287 = scalar_lea.vmem %s0, %s286
          %s288 = smul.u32 16, %s28
        $region36: #{tpu_custom_call.1} parent=31 // pred_fallthru
          _
        // Predicated region
        $region37: #{tpu_custom_call.1} parent=31 // pred_check
          %p289 = pneg %p81
        $region38: #{tpu_custom_call.1} parent=31 // pred_check_branch
          %291 = sbr.rel (%p289) target = $region40
        $region39: #{tpu_custom_call.1} parent=31 // pred_region
          %s292 = sand.u32 %s71, 1
          %s293 = sand.u32 %s71, 1
          %s294 = smul.addr %s293, 128
          %s295 = scalar_lea.vmem [#allocation3], %s294
          %s296 = smul.u32 16, %s28
          %s297 = smul.addr %s296, 2
          %s298 = sadd.s32 %s29, %s297
          %s299 = smul.addr %s298, 8
          %s300 = scalar_lea.vmem %s1, %s299
          // Predicated region
          $region41: #{tpu_custom_call.1} parent=39 // pred_check
            _
          $region42: #{tpu_custom_call.1} parent=39 // pred_check_branch
            %302 = sbr.rel (0) target = $region44
          $region43: #{tpu_custom_call.1} parent=39 // pred_region
            // Predicated region
            $region45: #{tpu_custom_call.1} parent=43 // pred_check
              _
            $region46: #{tpu_custom_call.1} parent=43 // pred_check_branch
              %304 = sbr.rel (0) target = $region48
            $region47: #{tpu_custom_call.1} parent=43 // pred_region
              // Predicated region
              $region60: #{tpu_custom_call.1} parent=47 // pred_check
                _
              $region61: #{tpu_custom_call.1} parent=47 // pred_check_branch
                %350 = sbr.rel (0) target = $region63
              $region62: #{tpu_custom_call.1} parent=47 // pred_region
                loop: start=0, step=1, limit=1
                $region64: #{tpu_custom_call.1} parent=62 // loop_pre_header
                  _
                $region65: #{tpu_custom_call.1} parent=62 // loop_header
                  %s352 = sphi 0, %s356
                  %p353 = scmp.ge.s32.totalorder %s352, 1
                  %s357 = sphi %s300, %s300
                  %s358 = sphi %s295, %s295
                $region66: #{tpu_custom_call.1} parent=62 // loop_header_branch
                  %355 = sbr.rel (%p353) target = $region70
                $region67: #{tpu_custom_call.1} parent=62 // loop_body
                  %v359 = vld [vmem:[%s357] sm:$0xff]
                  %360 = vst [vmem:[%s358] sm:$0xff] %v359
                  %v361 = vld [vmem:[%s357 + $0x10] sm:$0xff]
                  %362 = vst [vmem:[%s358 + $0x8] sm:$0xff] %v361
                  %v363 = vld [vmem:[%s357 + $0x20] sm:$0xff]
                  %364 = vst [vmem:[%s358 + $0x10] sm:$0xff] %v363
                  %v365 = vld [vmem:[%s357 + $0x30] sm:$0xff]
                  %366 = vst [vmem:[%s358 + $0x18] sm:$0xff] %v365
                  %v367 = vld [vmem:[%s357 + $0x40] sm:$0xff]
                  %368 = vst [vmem:[%s358 + $0x20] sm:$0xff] %v367
                  %v369 = vld [vmem:[%s357 + $0x50] sm:$0xff]
                  %370 = vst [vmem:[%s358 + $0x28] sm:$0xff] %v369
                  %v371 = vld [vmem:[%s357 + $0x60] sm:$0xff]
                  %372 = vst [vmem:[%s358 + $0x30] sm:$0xff] %v371
                  %v373 = vld [vmem:[%s357 + $0x70] sm:$0xff]
                  %374 = vst [vmem:[%s358 + $0x38] sm:$0xff] %v373
                  %v375 = vld [vmem:[%s357 + $0x80] sm:$0xff]
                  %376 = vst [vmem:[%s358 + $0x40] sm:$0xff] %v375
                  %v377 = vld [vmem:[%s357 + $0x90] sm:$0xff]
                  %378 = vst [vmem:[%s358 + $0x48] sm:$0xff] %v377
                  %v379 = vld [vmem:[%s357 + $0xa0] sm:$0xff]
                  %380 = vst [vmem:[%s358 + $0x50] sm:$0xff] %v379
                  %v381 = vld [vmem:[%s357 + $0xb0] sm:$0xff]
                  %382 = vst [vmem:[%s358 + $0x58] sm:$0xff] %v381
                  %v383 = vld [vmem:[%s357 + $0xc0] sm:$0xff]
                  %384 = vst [vmem:[%s358 + $0x60] sm:$0xff] %v383
                  %v385 = vld [vmem:[%s357 + $0xd0] sm:$0xff]
                  %386 = vst [vmem:[%s358 + $0x68] sm:$0xff] %v385
                  %v387 = vld [vmem:[%s357 + $0xe0] sm:$0xff]
                  %388 = vst [vmem:[%s358 + $0x70] sm:$0xff] %v387
                  %v389 = vld [vmem:[%s357 + $0xf0] sm:$0xff]
                  %390 = vst [vmem:[%s358 + $0x78] sm:$0xff] %v389
                $region68: #{tpu_custom_call.1} parent=62 // loop_footer
                  %s356 = sadd.s32 1, %s352
                $region69: #{tpu_custom_call.1} parent=62 // loop_footer_branch
                  %351 = sbr.rel target = $region65
                $region70: #{tpu_custom_call.1} parent=62 // loop_exit
                  _
              $region63: #{tpu_custom_call.1} parent=47 // pred_fallthru
                _
              // Predicated region
              $region71: #{tpu_custom_call.1} parent=47 // pred_check
                _
              $region72: #{tpu_custom_call.1} parent=47 // pred_check_branch
                %392 = sbr.rel target = $region74
              $region73: #{tpu_custom_call.1} parent=47 // pred_region
                _
              $region74: #{tpu_custom_call.1} parent=47 // pred_fallthru
                _
            $region48: #{tpu_custom_call.1} parent=43 // pred_fallthru
              _
            // Predicated region
            $region49: #{tpu_custom_call.1} parent=43 // pred_check
              _
            $region50: #{tpu_custom_call.1} parent=43 // pred_check_branch
              %306 = sbr.rel target = $region52
            $region51: #{tpu_custom_call.1} parent=43 // pred_region
              %s308 = ssub.s32 256, 1
              loop: start=0, step=1, limit=1
              $region53: #{tpu_custom_call.1} parent=51 // loop_pre_header
                _
              $region54: #{tpu_custom_call.1} parent=51 // loop_header
                %s310 = sphi 0, %s314
                %p311 = scmp.ge.s32.totalorder %s310, 1
                %s315 = sphi %s300, %s300
                %s316 = sphi %s295, %s295
              $region55: #{tpu_custom_call.1} parent=51 // loop_header_branch
                %313 = sbr.rel (%p311) target = $region59
              $region56: #{tpu_custom_call.1} parent=51 // loop_body
                %v317 = vld [vmem:[%s315] sm:%s308]
                %318 = vst [vmem:[%s316] sm:%s308] %v317
                %v319 = vld [vmem:[%s315 + $0x10] sm:%s308]
                %320 = vst [vmem:[%s316 + $0x8] sm:%s308] %v319
                %v321 = vld [vmem:[%s315 + $0x20] sm:%s308]
                %322 = vst [vmem:[%s316 + $0x10] sm:%s308] %v321
                %v323 = vld [vmem:[%s315 + $0x30] sm:%s308]
                %324 = vst [vmem:[%s316 + $0x18] sm:%s308] %v323
                %v325 = vld [vmem:[%s315 + $0x40] sm:%s308]
                %326 = vst [vmem:[%s316 + $0x20] sm:%s308] %v325
                %v327 = vld [vmem:[%s315 + $0x50] sm:%s308]
                %328 = vst [vmem:[%s316 + $0x28] sm:%s308] %v327
                %v329 = vld [vmem:[%s315 + $0x60] sm:%s308]
                %330 = vst [vmem:[%s316 + $0x30] sm:%s308] %v329
                %v331 = vld [vmem:[%s315 + $0x70] sm:%s308]
                %332 = vst [vmem:[%s316 + $0x38] sm:%s308] %v331
                %v333 = vld [vmem:[%s315 + $0x80] sm:%s308]
                %334 = vst [vmem:[%s316 + $0x40] sm:%s308] %v333
                %v335 = vld [vmem:[%s315 + $0x90] sm:%s308]
                %336 = vst [vmem:[%s316 + $0x48] sm:%s308] %v335
                %v337 = vld [vmem:[%s315 + $0xa0] sm:%s308]
                %338 = vst [vmem:[%s316 + $0x50] sm:%s308] %v337
                %v339 = vld [vmem:[%s315 + $0xb0] sm:%s308]
                %340 = vst [vmem:[%s316 + $0x58] sm:%s308] %v339
                %v341 = vld [vmem:[%s315 + $0xc0] sm:%s308]
                %342 = vst [vmem:[%s316 + $0x60] sm:%s308] %v341
                %v343 = vld [vmem:[%s315 + $0xd0] sm:%s308]
                %344 = vst [vmem:[%s316 + $0x68] sm:%s308] %v343
                %v345 = vld [vmem:[%s315 + $0xe0] sm:%s308]
                %346 = vst [vmem:[%s316 + $0x70] sm:%s308] %v345
                %v347 = vld [vmem:[%s315 + $0xf0] sm:%s308]
                %348 = vst [vmem:[%s316 + $0x78] sm:%s308] %v347
              $region57: #{tpu_custom_call.1} parent=51 // loop_footer
                %s314 = sadd.s32 1, %s310
              $region58: #{tpu_custom_call.1} parent=51 // loop_footer_branch
                %309 = sbr.rel target = $region54
              $region59: #{tpu_custom_call.1} parent=51 // loop_exit
                _
            $region52: #{tpu_custom_call.1} parent=43 // pred_fallthru
              _
          $region44: #{tpu_custom_call.1} parent=39 // pred_fallthru
            _
          %393 = vnop
        $region40: #{tpu_custom_call.1} parent=31 // pred_fallthru
          _
        // Predicated region
        $region75: #{tpu_custom_call.1} parent=31 // pred_check
          %p394 = pneg %p128
        $region76: #{tpu_custom_call.1} parent=31 // pred_check_branch
          %396 = sbr.rel (%p394) target = $region78
        $region77: #{tpu_custom_call.1} parent=31 // pred_region
          %s397 = smul.u32 16, %s29
          %p398 = scmp.lt.s32.totalorder %s397, 31
          %s399 = scalar_select %p398, %s397, 31
          %s400 = smul.addr %s399, 3
          %s401 = smul.addr %s400, 8
          %s402 = scalar_lea.vmem %s3, %s401
          %s403 = smul.u32 16, %s29
        $region78: #{tpu_custom_call.1} parent=31 // pred_fallthru
          _
      $region32: #{tpu_custom_call.1} parent=5 // pred_fallthru
        _
      %p404 = scmp.le.s32.totalorder 1, %s21
      %p405 = scmp.lt.s32.totalorder %s21, 5
      %p406 = pnand %p404, %p405
      %p407 = pneg %p406
      // Predicated region
      $region79: #{tpu_custom_call.1} parent=5 // pred_check
        _
      $region80: #{tpu_custom_call.1} parent=5 // pred_check_branch
        %409 = sbr.rel (%p406) target = $region82
      $region81: #{tpu_custom_call.1} parent=5 // pred_region
        %s410 = ssub.s32 %s21, 1
        %s411 = sand.u32 %s74, 1
        %s412 = sand.u32 %s74, 1
        %s413 = smul.addr %s412, 128
        %s414 = scalar_lea.vmem [#allocation3], %s413
        // Predicated region
        $region83: #{tpu_custom_call.1} parent=81 // pred_check
          %p415 = pneg %p87
        $region84: #{tpu_custom_call.1} parent=81 // pred_check_branch
          %417 = sbr.rel (%p415) target = $region86
        $region85: #{tpu_custom_call.1} parent=81 // pred_region
          _
        $region86: #{tpu_custom_call.1} parent=81 // pred_fallthru
          _
        %s418 = smul.u32 16, %s30
        %p419 = scmp.lt.s32.totalorder %s418, 31
        %s420 = scalar_select %p419, %s418, 31
        %s421 = smul.addr %s420, 8
        %s422 = scalar_lea.vmem %s0, %s421
        %p423 = pneg %p59
        %p424 = pneg %p56
        %s425 = sand.u32 %s74, 1
        %s426 = sand.u32 %s74, 1
        %s427 = smul.addr %s426, 128
        %s428 = scalar_lea.vmem [#allocation3], %s427
        %p429 = pneg %p87
        %p430 = pneg %p84
        %p431 = pneg %p108
        %p432 = pneg %p105
        %s433 = smul.u32 16, %s31
        %p434 = scmp.lt.s32.totalorder %s433, 31
        %s435 = scalar_select %p434, %s433, 31
        %s436 = smul.addr %s435, 3
        %s437 = smul.addr %s436, 8
        %s438 = scalar_lea.vmem %s3, %s437
        %p439 = pneg %p134
        %p440 = pneg %p131
        %p441 = pneg %p155
        %p442 = pneg %p152
        %p443 = pneg %p176
        %p444 = pneg %p173
        %p445 = pneg %p197
        %p446 = pneg %p194
        %p447 = pneg %p223
        %p448 = pneg %p220
        %s449 = sand.u32 %s210, 1
        %s450 = scalar_lea.sflag [#allocation5], %s449
        %s451 = sand.u32 %s210, 1
        %s452 = scalar_lea.vmem [#allocation4], %s451
        %p453 = pneg %p249
        %p454 = pneg %p246
        %s455 = sand.u32 %s236, 1
        %s456 = scalar_lea.sflag [#allocation7], %s455
        %s457 = sand.u32 %s236, 1
        %s458 = smul.addr %s457, 256
        %s459 = scalar_lea.vmem [#allocation6], %s458
        %s460 = smul.u32 16, %s30
        %p461 = scmp.lt.s32.totalorder %s460, 31
        %s462 = scalar_select %p461, %s460, 31
        %s463 = smul.addr %s462, 8
        %s464 = scalar_lea.vmem %s0, %s463
        %s465 = smul.u32 16, %s30
        %s466 = smul.u32 16, %s30
        %s467 = smul.u32 16, %s31
        %p468 = scmp.lt.s32.totalorder %s467, 31
        %s469 = scalar_select %p468, %s467, 31
        %s470 = smul.addr %s469, 3
        %s471 = smul.addr %s470, 8
        %s472 = scalar_lea.vmem %s3, %s471
        %s473 = smul.u32 16, %s31
        %s474 = smul.u32 16, %s30
        %p475 = scmp.eq.s32.totalorder %s31, 0
        // Predicated region
        $region87: #{tpu_custom_call.1} parent=81 // pred_check
          %p476 = pneg %p475
        $region88: #{tpu_custom_call.1} parent=81 // pred_check_branch
          %478 = sbr.rel (%p476) target = $region90
        $region89: #{tpu_custom_call.1} parent=81 // pred_region
          %v479 = vld [vmem:[%s464] sm:$0xff]
          %v480 = vld [vmem:[%s464 + $0x8] sm:$0xff]
          %v481 = vld [vmem:[%s464 + $0x10] sm:$0xff]
          %v482 = vld [vmem:[%s464 + $0x18] sm:$0xff]
          %v483 = vld [vmem:[%s464 + $0x20] sm:$0xff]
          %v484 = vld [vmem:[%s464 + $0x28] sm:$0xff]
          %v485 = vld [vmem:[%s464 + $0x30] sm:$0xff]
          %v486 = vld [vmem:[%s464 + $0x38] sm:$0xff]
          %v487 = vld [vmem:[%s464 + $0x40] sm:$0xff]
          %v488 = vld [vmem:[%s464 + $0x48] sm:$0xff]
          %v489 = vld [vmem:[%s464 + $0x50] sm:$0xff]
          %v490 = vld [vmem:[%s464 + $0x58] sm:$0xff]
          %v491 = vld [vmem:[%s464 + $0x60] sm:$0xff]
          %v492 = vld [vmem:[%s464 + $0x68] sm:$0xff]
          %v493 = vld [vmem:[%s464 + $0x70] sm:$0xff]
          %v494 = vld [vmem:[%s464 + $0x78] sm:$0xff]
          %v495 = vld [vmem:[%s2] sm:$0xff]
          %v496 = vld [vmem:[%s2 + $0x8] sm:$0xff]
          %v497 = vld [vmem:[%s2 + $0x10] sm:$0xff]
          %v498 = vld [vmem:[%s2 + $0x18] sm:$0xff]
          %vm499 = vcmask 130048
          %v501 = vsel %vm499, %v479, 0
          %v504 = vsel %vm499, %v480, 0
          %v507 = vsel %vm499, %v481, 0
          %v510 = vsel %vm499, %v482, 0
          %v513 = vsel %vm499, %v483, 0
          %v516 = vsel %vm499, %v484, 0
          %v519 = vsel %vm499, %v485, 0
          %v522 = vsel %vm499, %v486, 0
          %v525 = vsel %vm499, %v487, 0
          %v528 = vsel %vm499, %v488, 0
          %v531 = vsel %vm499, %v489, 0
          %v534 = vsel %vm499, %v490, 0
          %v537 = vsel %vm499, %v491, 0
          %v540 = vsel %vm499, %v492, 0
          %v543 = vsel %vm499, %v493, 0
          %v546 = vsel %vm499, %v494, 0
          %548 = vmatprep.subr.mxu0 0.0
          %549 = vmatpush1.msra.mxu0 0.0
          %550 = vmatprep.subr.mxu0 0.0
          %551 = vmatpush1.msra.mxu0 0.0
          %552 = vmatprep.subr.mxu0 0.0
          %553 = vmatpush1.msra.mxu0 0.0
          %554 = vmatprep.subr.mxu0 0.0
          %555 = vmatpush1.msra.mxu0 0.0
          %556 = vmatprep.subr.mxu0 0.0
          %557 = vmatpush1.msra.mxu0 0.0
          %558 = vmatprep.subr.mxu0 0.0
          %559 = vmatpush1.msra.mxu0 0.0
          %560 = vmatprep.subr.mxu0 0.0
          %561 = vmatpush1.msra.mxu0 0.0
          %562 = vmatprep.subr.mxu0 0.0
          %563 = vmatpush1.msra.mxu0 0.0
          %564 = vmatprep.subr.mxu0 0.0
          %565 = vmatpush1.msra.mxu0 0.0
          %566 = vmatprep.subr.mxu0 0.0
          %567 = vmatpush1.msra.mxu0 0.0
          %568 = vmatprep.subr.mxu0 0.0
          %569 = vmatpush1.msra.mxu0 0.0
          %570 = vmatprep.subr.mxu0 0.0
          %571 = vmatpush1.msra.mxu0 0.0
          %572 = vmatprep.subr.mxu0 0.0
          %573 = vmatpush1.msra.mxu0 0.0
          %574 = vmatprep.subr.mxu0 0.0
          %575 = vmatpush1.msra.mxu0 0.0
          %576 = vmatprep.subr.mxu0 %v498
          %577 = vmatpush1.msra.mxu0 %v497
          %578 = vmatprep.subr.mxu0 %v496
          %579 = vmatpush1.msra.mxu0 %v495
          %580 = vmatprep.subr.mxu0 0.0
          %581 = vmatpush2.msra.mxu0 0.0
          %582 = vmatprep.subr.mxu0 0.0
          %583 = vmatpush2.msra.mxu0 0.0
          %584 = vmatprep.subr.mxu0 0.0
          %585 = vmatpush2.msra.mxu0 0.0
          %586 = vmatprep.subr.mxu0 0.0
          %587 = vmatpush2.msra.mxu0 0.0
          %588 = vmatprep.subr.mxu0 0.0
          %589 = vmatpush2.msra.mxu0 0.0
          %590 = vmatprep.subr.mxu0 0.0
          %591 = vmatpush2.msra.mxu0 0.0
          %592 = vmatprep.subr.mxu0 0.0
          %593 = vmatpush2.msra.mxu0 0.0
          %594 = vmatprep.subr.mxu0 0.0
          %595 = vmatpush2.msra.mxu0 0.0
          %596 = vmatprep.subr.mxu0 0.0
          %597 = vmatpush2.msra.mxu0 0.0
          %598 = vmatprep.subr.mxu0 0.0
          %599 = vmatpush2.msra.mxu0 0.0
          %600 = vmatprep.subr.mxu0 0.0
          %601 = vmatpush2.msra.mxu0 0.0
          %602 = vmatprep.subr.mxu0 0.0
          %603 = vmatpush2.msra.mxu0 0.0
          %604 = vmatprep.subr.mxu0 0.0
          %605 = vmatpush2.msra.mxu0 0.0
          %606 = vmatprep.subr.mxu0 0.0
          %607 = vmatpush2.msra.mxu0 0.0
          %608 = vmatprep.subr.mxu0 0.0
          %609 = vmatpush2.msra.mxu0 0.0
          %610 = vmatprep.subr.mxu0 0.0
          %611 = vmatpush2.msra.mxu0 0.0
          %612 = vmatprep.mubr.f32.mxu0 0.0
          %613 = vmatmul.mubr.f32.gmra.mxu0 %v501
          %v614 = vpop.f32.mrf.mxu0
          %v615 = vadd.f32 0.0, %v614
          %v616 = vpop.f32.mrf.mxu0
          %v617 = vadd.f32 0.0, %v616
          %618 = vmatprep.mubr.f32.mxu0 0.0
          %619 = vmatmul.mubr.f32.gmra.mxu0 %v504
          %v620 = vpop.f32.mrf.mxu0
          %v621 = vadd.f32 0.0, %v620
          %v622 = vpop.f32.mrf.mxu0
          %v623 = vadd.f32 0.0, %v622
          %624 = vmatprep.mubr.f32.mxu0 0.0
          %625 = vmatmul.mubr.f32.gmra.mxu0 %v507
          %v626 = vpop.f32.mrf.mxu0
          %v627 = vadd.f32 0.0, %v626
          %v628 = vpop.f32.mrf.mxu0
          %v629 = vadd.f32 0.0, %v628
          %630 = vmatprep.mubr.f32.mxu0 0.0
          %631 = vmatmul.mubr.f32.gmra.mxu0 %v510
          %v632 = vpop.f32.mrf.mxu0
          %v633 = vadd.f32 0.0, %v632
          %v634 = vpop.f32.mrf.mxu0
          %v635 = vadd.f32 0.0, %v634
          %636 = vmatprep.mubr.f32.mxu0 0.0
          %637 = vmatmul.mubr.f32.gmra.mxu0 %v513
          %v638 = vpop.f32.mrf.mxu0
          %v639 = vadd.f32 0.0, %v638
          %v640 = vpop.f32.mrf.mxu0
          %v641 = vadd.f32 0.0, %v640
          %642 = vmatprep.mubr.f32.mxu0 0.0
          %643 = vmatmul.mubr.f32.gmra.mxu0 %v516
          %v644 = vpop.f32.mrf.mxu0
          %v645 = vadd.f32 0.0, %v644
          %v646 = vpop.f32.mrf.mxu0
          %v647 = vadd.f32 0.0, %v646
          %648 = vmatprep.mubr.f32.mxu0 0.0
          %649 = vmatmul.mubr.f32.gmra.mxu0 %v519
          %v650 = vpop.f32.mrf.mxu0
          %v651 = vadd.f32 0.0, %v650
          %v652 = vpop.f32.mrf.mxu0
          %v653 = vadd.f32 0.0, %v652
          %654 = vmatprep.mubr.f32.mxu0 0.0
          %655 = vmatmul.mubr.f32.gmra.mxu0 %v522
          %v656 = vpop.f32.mrf.mxu0
          %v657 = vadd.f32 0.0, %v656
          %v658 = vpop.f32.mrf.mxu0
          %v659 = vadd.f32 0.0, %v658
          %660 = vmatprep.mubr.f32.mxu0 0.0
          %661 = vmatmul.mubr.f32.gmra.mxu0 %v525
          %v662 = vpop.f32.mrf.mxu0
          %v663 = vadd.f32 0.0, %v662
          %v664 = vpop.f32.mrf.mxu0
          %v665 = vadd.f32 0.0, %v664
          %666 = vmatprep.mubr.f32.mxu0 0.0
          %667 = vmatmul.mubr.f32.gmra.mxu0 %v528
          %v668 = vpop.f32.mrf.mxu0
          %v669 = vadd.f32 0.0, %v668
          %v670 = vpop.f32.mrf.mxu0
          %v671 = vadd.f32 0.0, %v670
          %672 = vmatprep.mubr.f32.mxu0 0.0
          %673 = vmatmul.mubr.f32.gmra.mxu0 %v531
          %v674 = vpop.f32.mrf.mxu0
          %v675 = vadd.f32 0.0, %v674
          %v676 = vpop.f32.mrf.mxu0
          %v677 = vadd.f32 0.0, %v676
          %678 = vmatprep.mubr.f32.mxu0 0.0
          %679 = vmatmul.mubr.f32.gmra.mxu0 %v534
          %v680 = vpop.f32.mrf.mxu0
          %v681 = vadd.f32 0.0, %v680
          %v682 = vpop.f32.mrf.mxu0
          %v683 = vadd.f32 0.0, %v682
          %684 = vmatprep.mubr.f32.mxu0 0.0
          %685 = vmatmul.mubr.f32.gmra.mxu0 %v537
          %v686 = vpop.f32.mrf.mxu0
          %v687 = vadd.f32 0.0, %v686
          %v688 = vpop.f32.mrf.mxu0
          %v689 = vadd.f32 0.0, %v688
          %690 = vmatprep.mubr.f32.mxu0 0.0
          %691 = vmatmul.mubr.f32.gmra.mxu0 %v540
          %v692 = vpop.f32.mrf.mxu0
          %v693 = vadd.f32 0.0, %v692
          %v694 = vpop.f32.mrf.mxu0
          %v695 = vadd.f32 0.0, %v694
          %696 = vmatprep.mubr.f32.mxu0 0.0
          %697 = vmatmul.mubr.f32.gmra.mxu0 %v543
          %v698 = vpop.f32.mrf.mxu0
          %v699 = vadd.f32 0.0, %v698
          %v700 = vpop.f32.mrf.mxu0
          %v701 = vadd.f32 0.0, %v700
          %702 = vmatprep.mubr.f32.mxu0 0.0
          %703 = vmatmul.mubr.f32.gmra.mxu0 %v546
          %v704 = vpop.f32.mrf.mxu0
          %v705 = vadd.f32 0.0, %v704
          %v706 = vpop.f32.mrf.mxu0
          %v707 = vadd.f32 0.0, %v706
          %708 = vdwg.mxu0
          %709 = vst [vmem:[%s459] sm:$0xff] %v615
          %710 = vst [vmem:[%s459 + $0x8] sm:$0xff] %v617
          %711 = vst [vmem:[%s459 + $0x10] sm:$0xff] %v621
          %712 = vst [vmem:[%s459 + $0x18] sm:$0xff] %v623
          %713 = vst [vmem:[%s459 + $0x20] sm:$0xff] %v627
          %714 = vst [vmem:[%s459 + $0x28] sm:$0xff] %v629
          %715 = vst [vmem:[%s459 + $0x30] sm:$0xff] %v633
          %716 = vst [vmem:[%s459 + $0x38] sm:$0xff] %v635
          %717 = vst [vmem:[%s459 + $0x40] sm:$0xff] %v639
          %718 = vst [vmem:[%s459 + $0x48] sm:$0xff] %v641
          %719 = vst [vmem:[%s459 + $0x50] sm:$0xff] %v645
          %720 = vst [vmem:[%s459 + $0x58] sm:$0xff] %v647
          %721 = vst [vmem:[%s459 + $0x60] sm:$0xff] %v651
          %722 = vst [vmem:[%s459 + $0x68] sm:$0xff] %v653
          %723 = vst [vmem:[%s459 + $0x70] sm:$0xff] %v657
          %724 = vst [vmem:[%s459 + $0x78] sm:$0xff] %v659
          %725 = vst [vmem:[%s459 + $0x80] sm:$0xff] %v663
          %726 = vst [vmem:[%s459 + $0x88] sm:$0xff] %v665
          %727 = vst [vmem:[%s459 + $0x90] sm:$0xff] %v669
          %728 = vst [vmem:[%s459 + $0x98] sm:$0xff] %v671
          %729 = vst [vmem:[%s459 + $0xa0] sm:$0xff] %v675
          %730 = vst [vmem:[%s459 + $0xa8] sm:$0xff] %v677
          %731 = vst [vmem:[%s459 + $0xb0] sm:$0xff] %v681
          %732 = vst [vmem:[%s459 + $0xb8] sm:$0xff] %v683
          %733 = vst [vmem:[%s459 + $0xc0] sm:$0xff] %v687
          %734 = vst [vmem:[%s459 + $0xc8] sm:$0xff] %v689
          %735 = vst [vmem:[%s459 + $0xd0] sm:$0xff] %v693
          %736 = vst [vmem:[%s459 + $0xd8] sm:$0xff] %v695
          %737 = vst [vmem:[%s459 + $0xe0] sm:$0xff] %v699
          %738 = vst [vmem:[%s459 + $0xe8] sm:$0xff] %v701
          %739 = vst [vmem:[%s459 + $0xf0] sm:$0xff] %v705
          %740 = vst [vmem:[%s459 + $0xf8] sm:$0xff] %v707
          %vm741 = vcmask 523264
          %742 = vst.msk [vmem:[#allocation2] sm:$0xff] %vm741, 0.0
          %743 = vst.msk [vmem:[#allocation2 + $0x8] sm:$0xff] %vm741, 0.0
          %744 = vst.msk [vmem:[#allocation2 + $0x10] sm:$0xff] %vm741, 0.0
          %745 = vst.msk [vmem:[#allocation2 + $0x18] sm:$0xff] %vm741, 0.0
          %746 = vst.msk [vmem:[#allocation2 + $0x20] sm:$0xff] %vm741, 0.0
          %747 = vst.msk [vmem:[#allocation2 + $0x28] sm:$0xff] %vm741, 0.0
          %748 = vst.msk [vmem:[#allocation2 + $0x30] sm:$0xff] %vm741, 0.0
          %749 = vst.msk [vmem:[#allocation2 + $0x38] sm:$0xff] %vm741, 0.0
          %750 = vst.msk [vmem:[#allocation2 + $0x40] sm:$0xff] %vm741, 0.0
          %751 = vst.msk [vmem:[#allocation2 + $0x48] sm:$0xff] %vm741, 0.0
          %752 = vst.msk [vmem:[#allocation2 + $0x50] sm:$0xff] %vm741, 0.0
          %753 = vst.msk [vmem:[#allocation2 + $0x58] sm:$0xff] %vm741, 0.0
          %754 = vst.msk [vmem:[#allocation2 + $0x60] sm:$0xff] %vm741, 0.0
          %755 = vst.msk [vmem:[#allocation2 + $0x68] sm:$0xff] %vm741, 0.0
          %756 = vst.msk [vmem:[#allocation2 + $0x70] sm:$0xff] %vm741, 0.0
          %757 = vst.msk [vmem:[#allocation2 + $0x78] sm:$0xff] %vm741, 0.0
        $region90: #{tpu_custom_call.1} parent=81 // pred_fallthru
          _
        %v758 = vld [vmem:[%s414] sm:$0xff]
        %v759 = vld [vmem:[%s414 + $0x8] sm:$0xff]
        %v760 = vld [vmem:[%s414 + $0x10] sm:$0xff]
        %v761 = vld [vmem:[%s414 + $0x18] sm:$0xff]
        %v762 = vld [vmem:[%s414 + $0x20] sm:$0xff]
        %v763 = vld [vmem:[%s414 + $0x28] sm:$0xff]
        %v764 = vld [vmem:[%s414 + $0x30] sm:$0xff]
        %v765 = vld [vmem:[%s414 + $0x38] sm:$0xff]
        %v766 = vld [vmem:[%s414 + $0x40] sm:$0xff]
        %v767 = vld [vmem:[%s414 + $0x48] sm:$0xff]
        %v768 = vld [vmem:[%s414 + $0x50] sm:$0xff]
        %v769 = vld [vmem:[%s414 + $0x58] sm:$0xff]
        %v770 = vld [vmem:[%s414 + $0x60] sm:$0xff]
        %v771 = vld [vmem:[%s414 + $0x68] sm:$0xff]
        %v772 = vld [vmem:[%s414 + $0x70] sm:$0xff]
        %v773 = vld [vmem:[%s414 + $0x78] sm:$0xff]
        %v774 = vld [vmem:[%s472] sm:$0xff]
        %v775 = vld [vmem:[%s472 + $0x8] sm:$0xff]
        %v776 = vld [vmem:[%s472 + $0x10] sm:$0xff]
        %v777 = vld [vmem:[%s472 + $0x18] sm:$0xff]
        %v778 = vld [vmem:[%s472 + $0x20] sm:$0xff]
        %v779 = vld [vmem:[%s472 + $0x28] sm:$0xff]
        %v780 = vld [vmem:[%s472 + $0x30] sm:$0xff]
        %v781 = vld [vmem:[%s472 + $0x38] sm:$0xff]
        %v782 = vld [vmem:[%s472 + $0x40] sm:$0xff]
        %v783 = vld [vmem:[%s472 + $0x48] sm:$0xff]
        %v784 = vld [vmem:[%s472 + $0x50] sm:$0xff]
        %v785 = vld [vmem:[%s472 + $0x58] sm:$0xff]
        %v786 = vld [vmem:[%s472 + $0x60] sm:$0xff]
        %v787 = vld [vmem:[%s472 + $0x68] sm:$0xff]
        %v788 = vld [vmem:[%s472 + $0x70] sm:$0xff]
        %v789 = vld [vmem:[%s472 + $0x78] sm:$0xff]
        %v790 = vld [vmem:[%s472 + $0x80] sm:$0xff]
        %v791 = vld [vmem:[%s472 + $0x88] sm:$0xff]
        %v792 = vld [vmem:[%s472 + $0x90] sm:$0xff]
        %v793 = vld [vmem:[%s472 + $0x98] sm:$0xff]
        %v794 = vld [vmem:[%s472 + $0xa0] sm:$0xff]
        %v795 = vld [vmem:[%s472 + $0xa8] sm:$0xff]
        %v796 = vld [vmem:[%s472 + $0xb0] sm:$0xff]
        %v797 = vld [vmem:[%s472 + $0xb8] sm:$0xff]
        %v798 = vld [vmem:[%s472 + $0xc0] sm:$0xff]
        %v799 = vld [vmem:[%s472 + $0xc8] sm:$0xff]
        %v800 = vld [vmem:[%s472 + $0xd0] sm:$0xff]
        %v801 = vld [vmem:[%s472 + $0xd8] sm:$0xff]
        %v802 = vld [vmem:[%s472 + $0xe0] sm:$0xff]
        %v803 = vld [vmem:[%s472 + $0xe8] sm:$0xff]
        %v804 = vld [vmem:[%s472 + $0xf0] sm:$0xff]
        %v805 = vld [vmem:[%s472 + $0xf8] sm:$0xff]
        %v806 = vld [vmem:[%s472 + $0x100] sm:$0xff]
        %v807 = vld [vmem:[%s472 + $0x108] sm:$0xff]
        %v808 = vld [vmem:[%s472 + $0x110] sm:$0xff]
        %v809 = vld [vmem:[%s472 + $0x118] sm:$0xff]
        %v810 = vld [vmem:[%s472 + $0x120] sm:$0xff]
        %v811 = vld [vmem:[%s472 + $0x128] sm:$0xff]
        %v812 = vld [vmem:[%s472 + $0x130] sm:$0xff]
        %v813 = vld [vmem:[%s472 + $0x138] sm:$0xff]
        %v814 = vld [vmem:[%s472 + $0x140] sm:$0xff]
        %v815 = vld [vmem:[%s472 + $0x148] sm:$0xff]
        %v816 = vld [vmem:[%s472 + $0x150] sm:$0xff]
        %v817 = vld [vmem:[%s472 + $0x158] sm:$0xff]
        %v818 = vld [vmem:[%s472 + $0x160] sm:$0xff]
        %v819 = vld [vmem:[%s472 + $0x168] sm:$0xff]
        %v820 = vld [vmem:[%s472 + $0x170] sm:$0xff]
        %v821 = vld [vmem:[%s472 + $0x178] sm:$0xff]
        %822 = vmatprep.subr.mxu0 %v820
        %823 = vmatpush1.msra.mxu0 %v819
        %824 = vmatprep.subr.mxu0 %v817
        %825 = vmatpush1.msra.mxu0 %v816
        %826 = vmatprep.subr.mxu0 %v814
        %827 = vmatpush1.msra.mxu0 %v813
        %828 = vmatprep.subr.mxu0 %v811
        %829 = vmatpush1.msra.mxu0 %v810
        %830 = vmatprep.subr.mxu0 %v808
        %831 = vmatpush1.msra.mxu0 %v807
        %832 = vmatprep.subr.mxu0 %v805
        %833 = vmatpush1.msra.mxu0 %v804
        %834 = vmatprep.subr.mxu0 %v802
        %835 = vmatpush1.msra.mxu0 %v801
        %836 = vmatprep.subr.mxu0 %v799
        %837 = vmatpush1.msra.mxu0 %v798
        %838 = vmatprep.subr.mxu0 %v796
        %839 = vmatpush1.msra.mxu0 %v795
        %840 = vmatprep.subr.mxu0 %v793
        %841 = vmatpush1.msra.mxu0 %v792
        %842 = vmatprep.subr.mxu0 %v790
        %843 = vmatpush1.msra.mxu0 %v789
        %844 = vmatprep.subr.mxu0 %v787
        %845 = vmatpush1.msra.mxu0 %v786
        %846 = vmatprep.subr.mxu0 %v784
        %847 = vmatpush1.msra.mxu0 %v783
        %848 = vmatprep.subr.mxu0 %v781
        %849 = vmatpush1.msra.mxu0 %v780
        %850 = vmatprep.subr.mxu0 %v778
        %851 = vmatpush1.msra.mxu0 %v777
        %852 = vmatprep.subr.mxu0 %v775
        %853 = vmatpush1.msra.mxu0 %v774
        %854 = vmatprep.subr.mxu0 0.0
        %855 = vmatpush2.msra.mxu0 0.0
        %856 = vmatprep.subr.mxu0 0.0
        %857 = vmatpush2.msra.mxu0 0.0
        %858 = vmatprep.subr.mxu0 0.0
        %859 = vmatpush2.msra.mxu0 0.0
        %860 = vmatprep.subr.mxu0 0.0
        %861 = vmatpush2.msra.mxu0 0.0
        %862 = vmatprep.subr.mxu0 0.0
        %863 = vmatpush2.msra.mxu0 0.0
        %864 = vmatprep.subr.mxu0 0.0
        %865 = vmatpush2.msra.mxu0 0.0
        %866 = vmatprep.subr.mxu0 0.0
        %867 = vmatpush2.msra.mxu0 0.0
        %868 = vmatprep.subr.mxu0 0.0
        %869 = vmatpush2.msra.mxu0 0.0
        %870 = vmatprep.subr.mxu0 0.0
        %871 = vmatpush2.msra.mxu0 0.0
        %872 = vmatprep.subr.mxu0 0.0
        %873 = vmatpush2.msra.mxu0 0.0
        %874 = vmatprep.subr.mxu0 0.0
        %875 = vmatpush2.msra.mxu0 0.0
        %876 = vmatprep.subr.mxu0 0.0
        %877 = vmatpush2.msra.mxu0 0.0
        %878 = vmatprep.subr.mxu0 0.0
        %879 = vmatpush2.msra.mxu0 0.0
        %880 = vmatprep.subr.mxu0 0.0
        %881 = vmatpush2.msra.mxu0 0.0
        %882 = vmatprep.subr.mxu0 0.0
        %883 = vmatpush2.msra.mxu0 0.0
        %884 = vmatprep.subr.mxu0 0.0
        %885 = vmatpush2.msra.mxu0 0.0
        %886 = vmatprep.mubr.f32.mxu0 0.0
        %887 = vmatmul.mubr.f32.gmra.mxu0 %v758
        %v888 = vpop.f32.mrf.mxu0
        %v889 = vadd.f32 0.0, %v888
        %v890 = vpop.f32.mrf.mxu0
        %v891 = vadd.f32 0.0, %v890
        %892 = vmatprep.mubr.f32.mxu0 0.0
        %893 = vmatmul.mubr.f32.gmra.mxu0 %v759
        %v894 = vpop.f32.mrf.mxu0
        %v895 = vadd.f32 0.0, %v894
        %v896 = vpop.f32.mrf.mxu0
        %v897 = vadd.f32 0.0, %v896
        %898 = vmatprep.mubr.f32.mxu0 0.0
        %899 = vmatmul.mubr.f32.gmra.mxu0 %v760
        %v900 = vpop.f32.mrf.mxu0
        %v901 = vadd.f32 0.0, %v900
        %v902 = vpop.f32.mrf.mxu0
        %v903 = vadd.f32 0.0, %v902
        %904 = vmatprep.mubr.f32.mxu0 0.0
        %905 = vmatmul.mubr.f32.gmra.mxu0 %v761
        %v906 = vpop.f32.mrf.mxu0
        %v907 = vadd.f32 0.0, %v906
        %v908 = vpop.f32.mrf.mxu0
        %v909 = vadd.f32 0.0, %v908
        %910 = vmatprep.mubr.f32.mxu0 0.0
        %911 = vmatmul.mubr.f32.gmra.mxu0 %v762
        %v912 = vpop.f32.mrf.mxu0
        %v913 = vadd.f32 0.0, %v912
        %v914 = vpop.f32.mrf.mxu0
        %v915 = vadd.f32 0.0, %v914
        %916 = vmatprep.mubr.f32.mxu0 0.0
        %917 = vmatmul.mubr.f32.gmra.mxu0 %v763
        %v918 = vpop.f32.mrf.mxu0
        %v919 = vadd.f32 0.0, %v918
        %v920 = vpop.f32.mrf.mxu0
        %v921 = vadd.f32 0.0, %v920
        %922 = vmatprep.mubr.f32.mxu0 0.0
        %923 = vmatmul.mubr.f32.gmra.mxu0 %v764
        %v924 = vpop.f32.mrf.mxu0
        %v925 = vadd.f32 0.0, %v924
        %v926 = vpop.f32.mrf.mxu0
        %v927 = vadd.f32 0.0, %v926
        %928 = vmatprep.mubr.f32.mxu0 0.0
        %929 = vmatmul.mubr.f32.gmra.mxu0 %v765
        %v930 = vpop.f32.mrf.mxu0
        %v931 = vadd.f32 0.0, %v930
        %v932 = vpop.f32.mrf.mxu0
        %v933 = vadd.f32 0.0, %v932
        %934 = vmatprep.mubr.f32.mxu0 0.0
        %935 = vmatmul.mubr.f32.gmra.mxu0 %v766
        %v936 = vpop.f32.mrf.mxu0
        %v937 = vadd.f32 0.0, %v936
        %v938 = vpop.f32.mrf.mxu0
        %v939 = vadd.f32 0.0, %v938
        %940 = vmatprep.mubr.f32.mxu0 0.0
        %941 = vmatmul.mubr.f32.gmra.mxu0 %v767
        %v942 = vpop.f32.mrf.mxu0
        %v943 = vadd.f32 0.0, %v942
        %v944 = vpop.f32.mrf.mxu0
        %v945 = vadd.f32 0.0, %v944
        %946 = vmatprep.mubr.f32.mxu0 0.0
        %947 = vmatmul.mubr.f32.gmra.mxu0 %v768
        %v948 = vpop.f32.mrf.mxu0
        %v949 = vadd.f32 0.0, %v948
        %v950 = vpop.f32.mrf.mxu0
        %v951 = vadd.f32 0.0, %v950
        %952 = vmatprep.mubr.f32.mxu0 0.0
        %953 = vmatmul.mubr.f32.gmra.mxu0 %v769
        %v954 = vpop.f32.mrf.mxu0
        %v955 = vadd.f32 0.0, %v954
        %v956 = vpop.f32.mrf.mxu0
        %v957 = vadd.f32 0.0, %v956
        %958 = vmatprep.mubr.f32.mxu0 0.0
        %959 = vmatmul.mubr.f32.gmra.mxu0 %v770
        %v960 = vpop.f32.mrf.mxu0
        %v961 = vadd.f32 0.0, %v960
        %v962 = vpop.f32.mrf.mxu0
        %v963 = vadd.f32 0.0, %v962
        %964 = vmatprep.mubr.f32.mxu0 0.0
        %965 = vmatmul.mubr.f32.gmra.mxu0 %v771
        %v966 = vpop.f32.mrf.mxu0
        %v967 = vadd.f32 0.0, %v966
        %v968 = vpop.f32.mrf.mxu0
        %v969 = vadd.f32 0.0, %v968
        %970 = vmatprep.mubr.f32.mxu0 0.0
        %971 = vmatmul.mubr.f32.gmra.mxu0 %v772
        %v972 = vpop.f32.mrf.mxu0
        %v973 = vadd.f32 0.0, %v972
        %v974 = vpop.f32.mrf.mxu0
        %v975 = vadd.f32 0.0, %v974
        %976 = vmatprep.mubr.f32.mxu0 0.0
        %977 = vmatmul.mubr.f32.gmra.mxu0 %v773
        %v978 = vpop.f32.mrf.mxu0
        %v979 = vadd.f32 0.0, %v978
        %v980 = vpop.f32.mrf.mxu0
        %v981 = vadd.f32 0.0, %v980
        %982 = vdwg.mxu0
        %983 = vmatprep.subr.mxu0 0.0
        %984 = vmatpush1.msra.mxu0 %v821
        %985 = vmatprep.subr.mxu0 0.0
        %986 = vmatpush1.msra.mxu0 %v818
        %987 = vmatprep.subr.mxu0 0.0
        %988 = vmatpush1.msra.mxu0 %v815
        %989 = vmatprep.subr.mxu0 0.0
        %990 = vmatpush1.msra.mxu0 %v812
        %991 = vmatprep.subr.mxu0 0.0
        %992 = vmatpush1.msra.mxu0 %v809
        %993 = vmatprep.subr.mxu0 0.0
        %994 = vmatpush1.msra.mxu0 %v806
        %995 = vmatprep.subr.mxu0 0.0
        %996 = vmatpush1.msra.mxu0 %v803
        %997 = vmatprep.subr.mxu0 0.0
        %998 = vmatpush1.msra.mxu0 %v800
        %999 = vmatprep.subr.mxu0 0.0
        %1000 = vmatpush1.msra.mxu0 %v797
        %1001 = vmatprep.subr.mxu0 0.0
        %1002 = vmatpush1.msra.mxu0 %v794
        %1003 = vmatprep.subr.mxu0 0.0
        %1004 = vmatpush1.msra.mxu0 %v791
        %1005 = vmatprep.subr.mxu0 0.0
        %1006 = vmatpush1.msra.mxu0 %v788
        %1007 = vmatprep.subr.mxu0 0.0
        %1008 = vmatpush1.msra.mxu0 %v785
        %1009 = vmatprep.subr.mxu0 0.0
        %1010 = vmatpush1.msra.mxu0 %v782
        %1011 = vmatprep.subr.mxu0 0.0
        %1012 = vmatpush1.msra.mxu0 %v779
        %1013 = vmatprep.subr.mxu0 0.0
        %1014 = vmatpush1.msra.mxu0 %v776
        %1015 = vmatprep.subr.mxu0 0.0
        %1016 = vmatpush2.msra.mxu0 0.0
        %1017 = vmatprep.subr.mxu0 0.0
        %1018 = vmatpush2.msra.mxu0 0.0
        %1019 = vmatprep.subr.mxu0 0.0
        %1020 = vmatpush2.msra.mxu0 0.0
        %1021 = vmatprep.subr.mxu0 0.0
        %1022 = vmatpush2.msra.mxu0 0.0
        %1023 = vmatprep.subr.mxu0 0.0
        %1024 = vmatpush2.msra.mxu0 0.0
        %1025 = vmatprep.subr.mxu0 0.0
        %1026 = vmatpush2.msra.mxu0 0.0
        %1027 = vmatprep.subr.mxu0 0.0
        %1028 = vmatpush2.msra.mxu0 0.0
        %1029 = vmatprep.subr.mxu0 0.0
        %1030 = vmatpush2.msra.mxu0 0.0
        %1031 = vmatprep.subr.mxu0 0.0
        %1032 = vmatpush2.msra.mxu0 0.0
        %1033 = vmatprep.subr.mxu0 0.0
        %1034 = vmatpush2.msra.mxu0 0.0
        %1035 = vmatprep.subr.mxu0 0.0
        %1036 = vmatpush2.msra.mxu0 0.0
        %1037 = vmatprep.subr.mxu0 0.0
        %1038 = vmatpush2.msra.mxu0 0.0
        %1039 = vmatprep.subr.mxu0 0.0
        %1040 = vmatpush2.msra.mxu0 0.0
        %1041 = vmatprep.subr.mxu0 0.0
        %1042 = vmatpush2.msra.mxu0 0.0
        %1043 = vmatprep.subr.mxu0 0.0
        %1044 = vmatpush2.msra.mxu0 0.0
        %1045 = vmatprep.subr.mxu0 0.0
        %1046 = vmatpush2.msra.mxu0 0.0
        %1047 = vmatprep.mubr.f32.mxu0 0.0
        %1048 = vmatmul.mubr.f32.gmra.mxu0 %v758
        %v1049 = vpop.f32.mrf.mxu0
        %v1050 = vadd.f32 0.0, %v1049
        %v1051 = vpop.f32.mrf.mxu0
        %1052 = vmatprep.mubr.f32.mxu0 0.0
        %1053 = vmatmul.mubr.f32.gmra.mxu0 %v759
        %v1054 = vpop.f32.mrf.mxu0
        %v1055 = vadd.f32 0.0, %v1054
        %v1056 = vpop.f32.mrf.mxu0
        %1057 = vmatprep.mubr.f32.mxu0 0.0
        %1058 = vmatmul.mubr.f32.gmra.mxu0 %v760
        %v1059 = vpop.f32.mrf.mxu0
        %v1060 = vadd.f32 0.0, %v1059
        %v1061 = vpop.f32.mrf.mxu0
        %1062 = vmatprep.mubr.f32.mxu0 0.0
        %1063 = vmatmul.mubr.f32.gmra.mxu0 %v761
        %v1064 = vpop.f32.mrf.mxu0
        %v1065 = vadd.f32 0.0, %v1064
        %v1066 = vpop.f32.mrf.mxu0
        %1067 = vmatprep.mubr.f32.mxu0 0.0
        %1068 = vmatmul.mubr.f32.gmra.mxu0 %v762
        %v1069 = vpop.f32.mrf.mxu0
        %v1070 = vadd.f32 0.0, %v1069
        %v1071 = vpop.f32.mrf.mxu0
        %1072 = vmatprep.mubr.f32.mxu0 0.0
        %1073 = vmatmul.mubr.f32.gmra.mxu0 %v763
        %v1074 = vpop.f32.mrf.mxu0
        %v1075 = vadd.f32 0.0, %v1074
        %v1076 = vpop.f32.mrf.mxu0
        %1077 = vmatprep.mubr.f32.mxu0 0.0
        %1078 = vmatmul.mubr.f32.gmra.mxu0 %v764
        %v1079 = vpop.f32.mrf.mxu0
        %v1080 = vadd.f32 0.0, %v1079
        %v1081 = vpop.f32.mrf.mxu0
        %1082 = vmatprep.mubr.f32.mxu0 0.0
        %1083 = vmatmul.mubr.f32.gmra.mxu0 %v765
        %v1084 = vpop.f32.mrf.mxu0
        %v1085 = vadd.f32 0.0, %v1084
        %v1086 = vpop.f32.mrf.mxu0
        %1087 = vmatprep.mubr.f32.mxu0 0.0
        %1088 = vmatmul.mubr.f32.gmra.mxu0 %v766
        %v1089 = vpop.f32.mrf.mxu0
        %v1090 = vadd.f32 0.0, %v1089
        %v1091 = vpop.f32.mrf.mxu0
        %1092 = vmatprep.mubr.f32.mxu0 0.0
        %1093 = vmatmul.mubr.f32.gmra.mxu0 %v767
        %v1094 = vpop.f32.mrf.mxu0
        %v1095 = vadd.f32 0.0, %v1094
        %v1096 = vpop.f32.mrf.mxu0
        %1097 = vmatprep.mubr.f32.mxu0 0.0
        %1098 = vmatmul.mubr.f32.gmra.mxu0 %v768
        %v1099 = vpop.f32.mrf.mxu0
        %v1100 = vadd.f32 0.0, %v1099
        %v1101 = vpop.f32.mrf.mxu0
        %1102 = vmatprep.mubr.f32.mxu0 0.0
        %1103 = vmatmul.mubr.f32.gmra.mxu0 %v769
        %v1104 = vpop.f32.mrf.mxu0
        %v1105 = vadd.f32 0.0, %v1104
        %v1106 = vpop.f32.mrf.mxu0
        %1107 = vmatprep.mubr.f32.mxu0 0.0
        %1108 = vmatmul.mubr.f32.gmra.mxu0 %v770
        %v1109 = vpop.f32.mrf.mxu0
        %v1110 = vadd.f32 0.0, %v1109
        %v1111 = vpop.f32.mrf.mxu0
        %1112 = vmatprep.mubr.f32.mxu0 0.0
        %1113 = vmatmul.mubr.f32.gmra.mxu0 %v771
        %v1114 = vpop.f32.mrf.mxu0
        %v1115 = vadd.f32 0.0, %v1114
        %v1116 = vpop.f32.mrf.mxu0
        %1117 = vmatprep.mubr.f32.mxu0 0.0
        %1118 = vmatmul.mubr.f32.gmra.mxu0 %v772
        %v1119 = vpop.f32.mrf.mxu0
        %v1120 = vadd.f32 0.0, %v1119
        %v1121 = vpop.f32.mrf.mxu0
        %1122 = vmatprep.mubr.f32.mxu0 0.0
        %1123 = vmatmul.mubr.f32.gmra.mxu0 %v773
        %v1124 = vpop.f32.mrf.mxu0
        %v1125 = vadd.f32 0.0, %v1124
        %v1126 = vpop.f32.mrf.mxu0
        %1127 = vdwg.mxu0
        %v1128 = vld [vmem:[%s459] sm:$0xff]
        %v1129 = vld [vmem:[%s459 + $0x8] sm:$0xff]
        %v1130 = vld [vmem:[%s459 + $0x10] sm:$0xff]
        %v1131 = vld [vmem:[%s459 + $0x18] sm:$0xff]
        %v1132 = vld [vmem:[%s459 + $0x20] sm:$0xff]
        %v1133 = vld [vmem:[%s459 + $0x28] sm:$0xff]
        %v1134 = vld [vmem:[%s459 + $0x30] sm:$0xff]
        %v1135 = vld [vmem:[%s459 + $0x38] sm:$0xff]
        %v1136 = vld [vmem:[%s459 + $0x40] sm:$0xff]
        %v1137 = vld [vmem:[%s459 + $0x48] sm:$0xff]
        %v1138 = vld [vmem:[%s459 + $0x50] sm:$0xff]
        %v1139 = vld [vmem:[%s459 + $0x58] sm:$0xff]
        %v1140 = vld [vmem:[%s459 + $0x60] sm:$0xff]
        %v1141 = vld [vmem:[%s459 + $0x68] sm:$0xff]
        %v1142 = vld [vmem:[%s459 + $0x70] sm:$0xff]
        %v1143 = vld [vmem:[%s459 + $0x78] sm:$0xff]
        %v1144 = vld [vmem:[%s459 + $0x80] sm:$0xff]
        %v1145 = vld [vmem:[%s459 + $0x88] sm:$0xff]
        %v1146 = vld [vmem:[%s459 + $0x90] sm:$0xff]
        %v1147 = vld [vmem:[%s459 + $0x98] sm:$0xff]
        %v1148 = vld [vmem:[%s459 + $0xa0] sm:$0xff]
        %v1149 = vld [vmem:[%s459 + $0xa8] sm:$0xff]
        %v1150 = vld [vmem:[%s459 + $0xb0] sm:$0xff]
        %v1151 = vld [vmem:[%s459 + $0xb8] sm:$0xff]
        %v1152 = vld [vmem:[%s459 + $0xc0] sm:$0xff]
        %v1153 = vld [vmem:[%s459 + $0xc8] sm:$0xff]
        %v1154 = vld [vmem:[%s459 + $0xd0] sm:$0xff]
        %v1155 = vld [vmem:[%s459 + $0xd8] sm:$0xff]
        %v1156 = vld [vmem:[%s459 + $0xe0] sm:$0xff]
        %v1157 = vld [vmem:[%s459 + $0xe8] sm:$0xff]
        %v1158 = vld [vmem:[%s459 + $0xf0] sm:$0xff]
        %v1159 = vld [vmem:[%s459 + $0xf8] sm:$0xff]
        %v1160 = vadd.f32 %v1128, %v889
        %v1161 = vadd.f32 %v1129, %v891
        %v1162 = vadd.f32 %v1130, %v895
        %v1163 = vadd.f32 %v1131, %v897
        %v1164 = vadd.f32 %v1132, %v901
        %v1165 = vadd.f32 %v1133, %v903
        %v1166 = vadd.f32 %v1134, %v907
        %v1167 = vadd.f32 %v1135, %v909
        %v1168 = vadd.f32 %v1136, %v913
        %v1169 = vadd.f32 %v1137, %v915
        %v1170 = vadd.f32 %v1138, %v919
        %v1171 = vadd.f32 %v1139, %v921
        %v1172 = vadd.f32 %v1140, %v925
        %v1173 = vadd.f32 %v1141, %v927
        %v1174 = vadd.f32 %v1142, %v931
        %v1175 = vadd.f32 %v1143, %v933
        %v1176 = vadd.f32 %v1144, %v937
        %v1177 = vadd.f32 %v1145, %v939
        %v1178 = vadd.f32 %v1146, %v943
        %v1179 = vadd.f32 %v1147, %v945
        %v1180 = vadd.f32 %v1148, %v949
        %v1181 = vadd.f32 %v1149, %v951
        %v1182 = vadd.f32 %v1150, %v955
        %v1183 = vadd.f32 %v1151, %v957
        %v1184 = vadd.f32 %v1152, %v961
        %v1185 = vadd.f32 %v1153, %v963
        %v1186 = vadd.f32 %v1154, %v967
        %v1187 = vadd.f32 %v1155, %v969
        %v1188 = vadd.f32 %v1156, %v973
        %v1189 = vadd.f32 %v1157, %v975
        %v1190 = vadd.f32 %v1158, %v979
        %v1191 = vadd.f32 %v1159, %v981
        %1192 = vst [vmem:[%s459] sm:$0xff] %v1160
        %1193 = vst [vmem:[%s459 + $0x8] sm:$0xff] %v1161
        %1194 = vst [vmem:[%s459 + $0x10] sm:$0xff] %v1162
        %1195 = vst [vmem:[%s459 + $0x18] sm:$0xff] %v1163
        %1196 = vst [vmem:[%s459 + $0x20] sm:$0xff] %v1164
        %1197 = vst [vmem:[%s459 + $0x28] sm:$0xff] %v1165
        %1198 = vst [vmem:[%s459 + $0x30] sm:$0xff] %v1166
        %1199 = vst [vmem:[%s459 + $0x38] sm:$0xff] %v1167
        %1200 = vst [vmem:[%s459 + $0x40] sm:$0xff] %v1168
        %1201 = vst [vmem:[%s459 + $0x48] sm:$0xff] %v1169
        %1202 = vst [vmem:[%s459 + $0x50] sm:$0xff] %v1170
        %1203 = vst [vmem:[%s459 + $0x58] sm:$0xff] %v1171
        %1204 = vst [vmem:[%s459 + $0x60] sm:$0xff] %v1172
        %1205 = vst [vmem:[%s459 + $0x68] sm:$0xff] %v1173
        %1206 = vst [vmem:[%s459 + $0x70] sm:$0xff] %v1174
        %1207 = vst [vmem:[%s459 + $0x78] sm:$0xff] %v1175
        %1208 = vst [vmem:[%s459 + $0x80] sm:$0xff] %v1176
        %1209 = vst [vmem:[%s459 + $0x88] sm:$0xff] %v1177
        %1210 = vst [vmem:[%s459 + $0x90] sm:$0xff] %v1178
        %1211 = vst [vmem:[%s459 + $0x98] sm:$0xff] %v1179
        %1212 = vst [vmem:[%s459 + $0xa0] sm:$0xff] %v1180
        %1213 = vst [vmem:[%s459 + $0xa8] sm:$0xff] %v1181
        %1214 = vst [vmem:[%s459 + $0xb0] sm:$0xff] %v1182
        %1215 = vst [vmem:[%s459 + $0xb8] sm:$0xff] %v1183
        %1216 = vst [vmem:[%s459 + $0xc0] sm:$0xff] %v1184
        %1217 = vst [vmem:[%s459 + $0xc8] sm:$0xff] %v1185
        %1218 = vst [vmem:[%s459 + $0xd0] sm:$0xff] %v1186
        %1219 = vst [vmem:[%s459 + $0xd8] sm:$0xff] %v1187
        %1220 = vst [vmem:[%s459 + $0xe0] sm:$0xff] %v1188
        %1221 = vst [vmem:[%s459 + $0xe8] sm:$0xff] %v1189
        %1222 = vst [vmem:[%s459 + $0xf0] sm:$0xff] %v1190
        %1223 = vst [vmem:[%s459 + $0xf8] sm:$0xff] %v1191
        %v1224 = vld [vmem:[#allocation2] sm:$0xff]
        %v1225 = vld [vmem:[#allocation2 + $0x8] sm:$0xff]
        %v1226 = vld [vmem:[#allocation2 + $0x10] sm:$0xff]
        %v1227 = vld [vmem:[#allocation2 + $0x18] sm:$0xff]
        %v1228 = vld [vmem:[#allocation2 + $0x20] sm:$0xff]
        %v1229 = vld [vmem:[#allocation2 + $0x28] sm:$0xff]
        %v1230 = vld [vmem:[#allocation2 + $0x30] sm:$0xff]
        %v1231 = vld [vmem:[#allocation2 + $0x38] sm:$0xff]
        %v1232 = vld [vmem:[#allocation2 + $0x40] sm:$0xff]
        %v1233 = vld [vmem:[#allocation2 + $0x48] sm:$0xff]
        %v1234 = vld [vmem:[#allocation2 + $0x50] sm:$0xff]
        %v1235 = vld [vmem:[#allocation2 + $0x58] sm:$0xff]
        %v1236 = vld [vmem:[#allocation2 + $0x60] sm:$0xff]
        %v1237 = vld [vmem:[#allocation2 + $0x68] sm:$0xff]
        %v1238 = vld [vmem:[#allocation2 + $0x70] sm:$0xff]
        %v1239 = vld [vmem:[#allocation2 + $0x78] sm:$0xff]
        %v1240 = vadd.f32 %v1224, %v1050
        %v1241 = vadd.f32 %v1225, %v1055
        %v1242 = vadd.f32 %v1226, %v1060
        %v1243 = vadd.f32 %v1227, %v1065
        %v1244 = vadd.f32 %v1228, %v1070
        %v1245 = vadd.f32 %v1229, %v1075
        %v1246 = vadd.f32 %v1230, %v1080
        %v1247 = vadd.f32 %v1231, %v1085
        %v1248 = vadd.f32 %v1232, %v1090
        %v1249 = vadd.f32 %v1233, %v1095
        %v1250 = vadd.f32 %v1234, %v1100
        %v1251 = vadd.f32 %v1235, %v1105
        %v1252 = vadd.f32 %v1236, %v1110
        %v1253 = vadd.f32 %v1237, %v1115
        %v1254 = vadd.f32 %v1238, %v1120
        %v1255 = vadd.f32 %v1239, %v1125
        %vm1256 = vcmask 523264
        %1257 = vst.msk [vmem:[#allocation2] sm:$0xff] %vm1256, %v1240
        %1258 = vst.msk [vmem:[#allocation2 + $0x8] sm:$0xff] %vm1256, %v1241
        %1259 = vst.msk [vmem:[#allocation2 + $0x10] sm:$0xff] %vm1256, %v1242
        %1260 = vst.msk [vmem:[#allocation2 + $0x18] sm:$0xff] %vm1256, %v1243
        %1261 = vst.msk [vmem:[#allocation2 + $0x20] sm:$0xff] %vm1256, %v1244
        %1262 = vst.msk [vmem:[#allocation2 + $0x28] sm:$0xff] %vm1256, %v1245
        %1263 = vst.msk [vmem:[#allocation2 + $0x30] sm:$0xff] %vm1256, %v1246
        %1264 = vst.msk [vmem:[#allocation2 + $0x38] sm:$0xff] %vm1256, %v1247
        %1265 = vst.msk [vmem:[#allocation2 + $0x40] sm:$0xff] %vm1256, %v1248
        %1266 = vst.msk [vmem:[#allocation2 + $0x48] sm:$0xff] %vm1256, %v1249
        %1267 = vst.msk [vmem:[#allocation2 + $0x50] sm:$0xff] %vm1256, %v1250
        %1268 = vst.msk [vmem:[#allocation2 + $0x58] sm:$0xff] %vm1256, %v1251
        %1269 = vst.msk [vmem:[#allocation2 + $0x60] sm:$0xff] %vm1256, %v1252
        %1270 = vst.msk [vmem:[#allocation2 + $0x68] sm:$0xff] %vm1256, %v1253
        %1271 = vst.msk [vmem:[#allocation2 + $0x70] sm:$0xff] %vm1256, %v1254
        %1272 = vst.msk [vmem:[#allocation2 + $0x78] sm:$0xff] %vm1256, %v1255
        %p1273 = scmp.eq.s32.totalorder %s31, 1
        // Predicated region
        $region91: #{tpu_custom_call.1} parent=81 // pred_check
          %p1274 = pneg %p1273
        $region92: #{tpu_custom_call.1} parent=81 // pred_check_branch
          %1276 = sbr.rel (%p1274) target = $region94
        $region93: #{tpu_custom_call.1} parent=81 // pred_region
          %v1277 = vld [vmem:[%s459] sm:$0xff]
          %v1278 = vld [vmem:[%s459 + $0x8] sm:$0xff]
          %v1279 = vld [vmem:[%s459 + $0x10] sm:$0xff]
          %v1280 = vld [vmem:[%s459 + $0x18] sm:$0xff]
          %v1281 = vld [vmem:[%s459 + $0x20] sm:$0xff]
          %v1282 = vld [vmem:[%s459 + $0x28] sm:$0xff]
          %v1283 = vld [vmem:[%s459 + $0x30] sm:$0xff]
          %v1284 = vld [vmem:[%s459 + $0x38] sm:$0xff]
          %v1285 = vld [vmem:[%s459 + $0x40] sm:$0xff]
          %v1286 = vld [vmem:[%s459 + $0x48] sm:$0xff]
          %v1287 = vld [vmem:[%s459 + $0x50] sm:$0xff]
          %v1288 = vld [vmem:[%s459 + $0x58] sm:$0xff]
          %v1289 = vld [vmem:[%s459 + $0x60] sm:$0xff]
          %v1290 = vld [vmem:[%s459 + $0x68] sm:$0xff]
          %v1291 = vld [vmem:[%s459 + $0x70] sm:$0xff]
          %v1292 = vld [vmem:[%s459 + $0x78] sm:$0xff]
          %v1293 = vld [vmem:[%s459 + $0x80] sm:$0xff]
          %v1294 = vld [vmem:[%s459 + $0x88] sm:$0xff]
          %v1295 = vld [vmem:[%s459 + $0x90] sm:$0xff]
          %v1296 = vld [vmem:[%s459 + $0x98] sm:$0xff]
          %v1297 = vld [vmem:[%s459 + $0xa0] sm:$0xff]
          %v1298 = vld [vmem:[%s459 + $0xa8] sm:$0xff]
          %v1299 = vld [vmem:[%s459 + $0xb0] sm:$0xff]
          %v1300 = vld [vmem:[%s459 + $0xb8] sm:$0xff]
          %v1301 = vld [vmem:[%s459 + $0xc0] sm:$0xff]
          %v1302 = vld [vmem:[%s459 + $0xc8] sm:$0xff]
          %v1303 = vld [vmem:[%s459 + $0xd0] sm:$0xff]
          %v1304 = vld [vmem:[%s459 + $0xd8] sm:$0xff]
          %v1305 = vld [vmem:[%s459 + $0xe0] sm:$0xff]
          %v1306 = vld [vmem:[%s459 + $0xe8] sm:$0xff]
          %v1307 = vld [vmem:[%s459 + $0xf0] sm:$0xff]
          %v1308 = vld [vmem:[%s459 + $0xf8] sm:$0xff]
          %v1309 = vld [vmem:[%s4] sm:$0xff]
          %v1310 = vld [vmem:[%s4 + $0x8] sm:$0xff]
          %v1311 = vld [vmem:[%s4 + $0x10] sm:$0xff]
          %v1312 = vld [vmem:[%s4 + $0x18] sm:$0xff]
          %v1313 = vld [vmem:[%s4 + $0x20] sm:$0xff]
          %v1314 = vld [vmem:[%s4 + $0x28] sm:$0xff]
          %v1315 = vld [vmem:[%s4 + $0x30] sm:$0xff]
          %v1316 = vld [vmem:[%s4 + $0x38] sm:$0xff]
          %v1317 = vld [vmem:[%s4 + $0x40] sm:$0xff]
          %v1318 = vld [vmem:[%s4 + $0x48] sm:$0xff]
          %v1319 = vld [vmem:[%s4 + $0x50] sm:$0xff]
          %v1320 = vld [vmem:[%s4 + $0x58] sm:$0xff]
          %v1321 = vld [vmem:[%s4 + $0x60] sm:$0xff]
          %v1322 = vld [vmem:[%s4 + $0x68] sm:$0xff]
          %v1323 = vld [vmem:[%s4 + $0x70] sm:$0xff]
          %v1324 = vld [vmem:[%s4 + $0x78] sm:$0xff]
          %v1325 = vld [vmem:[%s4 + $0x80] sm:$0xff]
          %v1326 = vld [vmem:[%s4 + $0x88] sm:$0xff]
          %v1327 = vld [vmem:[%s4 + $0x90] sm:$0xff]
          %v1328 = vld [vmem:[%s4 + $0x98] sm:$0xff]
          %v1329 = vld [vmem:[%s4 + $0xa0] sm:$0xff]
          %v1330 = vld [vmem:[%s4 + $0xa8] sm:$0xff]
          %v1331 = vld [vmem:[%s4 + $0xb0] sm:$0xff]
          %v1332 = vld [vmem:[%s4 + $0xb8] sm:$0xff]
          %v1333 = vld [vmem:[%s4 + $0xc0] sm:$0xff]
          %v1334 = vld [vmem:[%s4 + $0xc8] sm:$0xff]
          %v1335 = vld [vmem:[%s4 + $0xd0] sm:$0xff]
          %v1336 = vld [vmem:[%s4 + $0xd8] sm:$0xff]
          %v1337 = vld [vmem:[%s4 + $0xe0] sm:$0xff]
          %v1338 = vld [vmem:[%s4 + $0xe8] sm:$0xff]
          %v1339 = vld [vmem:[%s4 + $0xf0] sm:$0xff]
          %v1340 = vld [vmem:[%s4 + $0xf8] sm:$0xff]
          %v1341 = vld [vmem:[%s5] sm:$0x1]
          %v1343 = vlaneseq
          %v1344 = vshrl.u32 %v1343, 7
          %v1345 = vsub.s32 0, %v1344
          %v1346 = vrot.slane %v1341, %v1345
          %1348 = vmatprep.subr.mxu0 0.0
          %1349 = vmatpush1.msra.mxu0 %v1324
          %1350 = vmatprep.subr.mxu0 0.0
          %1351 = vmatpush1.msra.mxu0 %v1323
          %1352 = vmatprep.subr.mxu0 0.0
          %1353 = vmatpush1.msra.mxu0 %v1322
          %1354 = vmatprep.subr.mxu0 0.0
          %1355 = vmatpush1.msra.mxu0 %v1321
          %1356 = vmatprep.subr.mxu0 0.0
          %1357 = vmatpush1.msra.mxu0 %v1320
          %1358 = vmatprep.subr.mxu0 0.0
          %1359 = vmatpush1.msra.mxu0 %v1319
          %1360 = vmatprep.subr.mxu0 0.0
          %1361 = vmatpush1.msra.mxu0 %v1318
          %1362 = vmatprep.subr.mxu0 0.0
          %1363 = vmatpush1.msra.mxu0 %v1317
          %1364 = vmatprep.subr.mxu0 0.0
          %1365 = vmatpush1.msra.mxu0 %v1316
          %1366 = vmatprep.subr.mxu0 0.0
          %1367 = vmatpush1.msra.mxu0 %v1315
          %1368 = vmatprep.subr.mxu0 0.0
          %1369 = vmatpush1.msra.mxu0 %v1314
          %1370 = vmatprep.subr.mxu0 0.0
          %1371 = vmatpush1.msra.mxu0 %v1313
          %1372 = vmatprep.subr.mxu0 0.0
          %1373 = vmatpush1.msra.mxu0 %v1312
          %1374 = vmatprep.subr.mxu0 0.0
          %1375 = vmatpush1.msra.mxu0 %v1311
          %1376 = vmatprep.subr.mxu0 0.0
          %1377 = vmatpush1.msra.mxu0 %v1310
          %1378 = vmatprep.subr.mxu0 0.0
          %1379 = vmatpush1.msra.mxu0 %v1309
          %1380 = vmatprep.subr.mxu0 0.0
          %1381 = vmatpush2.msra.mxu0 %v1340
          %1382 = vmatprep.subr.mxu0 0.0
          %1383 = vmatpush2.msra.mxu0 %v1339
          %1384 = vmatprep.subr.mxu0 0.0
          %1385 = vmatpush2.msra.mxu0 %v1338
          %1386 = vmatprep.subr.mxu0 0.0
          %1387 = vmatpush2.msra.mxu0 %v1337
          %1388 = vmatprep.subr.mxu0 0.0
          %1389 = vmatpush2.msra.mxu0 %v1336
          %1390 = vmatprep.subr.mxu0 0.0
          %1391 = vmatpush2.msra.mxu0 %v1335
          %1392 = vmatprep.subr.mxu0 0.0
          %1393 = vmatpush2.msra.mxu0 %v1334
          %1394 = vmatprep.subr.mxu0 0.0
          %1395 = vmatpush2.msra.mxu0 %v1333
          %1396 = vmatprep.subr.mxu0 0.0
          %1397 = vmatpush2.msra.mxu0 %v1332
          %1398 = vmatprep.subr.mxu0 0.0
          %1399 = vmatpush2.msra.mxu0 %v1331
          %1400 = vmatprep.subr.mxu0 0.0
          %1401 = vmatpush2.msra.mxu0 %v1330
          %1402 = vmatprep.subr.mxu0 0.0
          %1403 = vmatpush2.msra.mxu0 %v1329
          %1404 = vmatprep.subr.mxu0 0.0
          %1405 = vmatpush2.msra.mxu0 %v1328
          %1406 = vmatprep.subr.mxu0 0.0
          %1407 = vmatpush2.msra.mxu0 %v1327
          %1408 = vmatprep.subr.mxu0 0.0
          %1409 = vmatpush2.msra.mxu0 %v1326
          %1410 = vmatprep.subr.mxu0 0.0
          %1411 = vmatpush2.msra.mxu0 %v1325
          %1412 = vmatprep.mubr.f32.mxu0 %v1278
          %1413 = vmatmul.mubr.f32.gmra.mxu0 %v1277
          %v1414 = vpop.f32.mrf.mxu0
          %v1415 = vadd.f32 %v1346, %v1414
          %v1416 = vpop.f32.mrf.mxu0
          %1417 = vmatprep.mubr.f32.mxu0 %v1280
          %1418 = vmatmul.mubr.f32.gmra.mxu0 %v1279
          %v1419 = vpop.f32.mrf.mxu0
          %v1420 = vadd.f32 %v1346, %v1419
          %v1421 = vpop.f32.mrf.mxu0
          %1422 = vmatprep.mubr.f32.mxu0 %v1282
          %1423 = vmatmul.mubr.f32.gmra.mxu0 %v1281
          %v1424 = vpop.f32.mrf.mxu0
          %v1425 = vadd.f32 %v1346, %v1424
          %v1426 = vpop.f32.mrf.mxu0
          %1427 = vmatprep.mubr.f32.mxu0 %v1284
          %1428 = vmatmul.mubr.f32.gmra.mxu0 %v1283
          %v1429 = vpop.f32.mrf.mxu0
          %v1430 = vadd.f32 %v1346, %v1429
          %v1431 = vpop.f32.mrf.mxu0
          %1432 = vmatprep.mubr.f32.mxu0 %v1286
          %1433 = vmatmul.mubr.f32.gmra.mxu0 %v1285
          %v1434 = vpop.f32.mrf.mxu0
          %v1435 = vadd.f32 %v1346, %v1434
          %v1436 = vpop.f32.mrf.mxu0
          %1437 = vmatprep.mubr.f32.mxu0 %v1288
          %1438 = vmatmul.mubr.f32.gmra.mxu0 %v1287
          %v1439 = vpop.f32.mrf.mxu0
          %v1440 = vadd.f32 %v1346, %v1439
          %v1441 = vpop.f32.mrf.mxu0
          %1442 = vmatprep.mubr.f32.mxu0 %v1290
          %1443 = vmatmul.mubr.f32.gmra.mxu0 %v1289
          %v1444 = vpop.f32.mrf.mxu0
          %v1445 = vadd.f32 %v1346, %v1444
          %v1446 = vpop.f32.mrf.mxu0
          %1447 = vmatprep.mubr.f32.mxu0 %v1292
          %1448 = vmatmul.mubr.f32.gmra.mxu0 %v1291
          %v1449 = vpop.f32.mrf.mxu0
          %v1450 = vadd.f32 %v1346, %v1449
          %v1451 = vpop.f32.mrf.mxu0
          %1452 = vmatprep.mubr.f32.mxu0 %v1294
          %1453 = vmatmul.mubr.f32.gmra.mxu0 %v1293
          %v1454 = vpop.f32.mrf.mxu0
          %v1455 = vadd.f32 %v1346, %v1454
          %v1456 = vpop.f32.mrf.mxu0
          %1457 = vmatprep.mubr.f32.mxu0 %v1296
          %1458 = vmatmul.mubr.f32.gmra.mxu0 %v1295
          %v1459 = vpop.f32.mrf.mxu0
          %v1460 = vadd.f32 %v1346, %v1459
          %v1461 = vpop.f32.mrf.mxu0
          %1462 = vmatprep.mubr.f32.mxu0 %v1298
          %1463 = vmatmul.mubr.f32.gmra.mxu0 %v1297
          %v1464 = vpop.f32.mrf.mxu0
          %v1465 = vadd.f32 %v1346, %v1464
          %v1466 = vpop.f32.mrf.mxu0
          %1467 = vmatprep.mubr.f32.mxu0 %v1300
          %1468 = vmatmul.mubr.f32.gmra.mxu0 %v1299
          %v1469 = vpop.f32.mrf.mxu0
          %v1470 = vadd.f32 %v1346, %v1469
          %v1471 = vpop.f32.mrf.mxu0
          %1472 = vmatprep.mubr.f32.mxu0 %v1302
          %1473 = vmatmul.mubr.f32.gmra.mxu0 %v1301
          %v1474 = vpop.f32.mrf.mxu0
          %v1475 = vadd.f32 %v1346, %v1474
          %v1476 = vpop.f32.mrf.mxu0
          %1477 = vmatprep.mubr.f32.mxu0 %v1304
          %1478 = vmatmul.mubr.f32.gmra.mxu0 %v1303
          %v1479 = vpop.f32.mrf.mxu0
          %v1480 = vadd.f32 %v1346, %v1479
          %v1481 = vpop.f32.mrf.mxu0
          %1482 = vmatprep.mubr.f32.mxu0 %v1306
          %1483 = vmatmul.mubr.f32.gmra.mxu0 %v1305
          %v1484 = vpop.f32.mrf.mxu0
          %v1485 = vadd.f32 %v1346, %v1484
          %v1486 = vpop.f32.mrf.mxu0
          %1487 = vmatprep.mubr.f32.mxu0 %v1308
          %1488 = vmatmul.mubr.f32.gmra.mxu0 %v1307
          %v1489 = vpop.f32.mrf.mxu0
          %v1490 = vadd.f32 %v1346, %v1489
          %v1491 = vpop.f32.mrf.mxu0
          %1492 = vdwg.mxu0
          %v1493 = vld [vmem:[#allocation2] sm:$0xff]
          %v1494 = vld [vmem:[#allocation2 + $0x8] sm:$0xff]
          %v1495 = vld [vmem:[#allocation2 + $0x10] sm:$0xff]
          %v1496 = vld [vmem:[#allocation2 + $0x18] sm:$0xff]
          %v1497 = vld [vmem:[#allocation2 + $0x20] sm:$0xff]
          %v1498 = vld [vmem:[#allocation2 + $0x28] sm:$0xff]
          %v1499 = vld [vmem:[#allocation2 + $0x30] sm:$0xff]
          %v1500 = vld [vmem:[#allocation2 + $0x38] sm:$0xff]
          %v1501 = vld [vmem:[#allocation2 + $0x40] sm:$0xff]
          %v1502 = vld [vmem:[#allocation2 + $0x48] sm:$0xff]
          %v1503 = vld [vmem:[#allocation2 + $0x50] sm:$0xff]
          %v1504 = vld [vmem:[#allocation2 + $0x58] sm:$0xff]
          %v1505 = vld [vmem:[#allocation2 + $0x60] sm:$0xff]
          %v1506 = vld [vmem:[#allocation2 + $0x68] sm:$0xff]
          %v1507 = vld [vmem:[#allocation2 + $0x70] sm:$0xff]
          %v1508 = vld [vmem:[#allocation2 + $0x78] sm:$0xff]
          %v1509 = vld [vmem:[%s6] sm:$0x1]
          %v1511 = vlaneseq
          %v1512 = vshrl.u32 %v1511, 7
          %v1513 = vsub.s32 0, %v1512
          %v1514 = vrot.slane %v1509, %v1513
          %v1516 = vadd.f32 %v1493, %v1514
          %v1517 = vadd.f32 %v1494, %v1514
          %v1518 = vadd.f32 %v1495, %v1514
          %v1519 = vadd.f32 %v1496, %v1514
          %v1520 = vadd.f32 %v1497, %v1514
          %v1521 = vadd.f32 %v1498, %v1514
          %v1522 = vadd.f32 %v1499, %v1514
          %v1523 = vadd.f32 %v1500, %v1514
          %v1524 = vadd.f32 %v1501, %v1514
          %v1525 = vadd.f32 %v1502, %v1514
          %v1526 = vadd.f32 %v1503, %v1514
          %v1527 = vadd.f32 %v1504, %v1514
          %v1528 = vadd.f32 %v1505, %v1514
          %v1529 = vadd.f32 %v1506, %v1514
          %v1530 = vadd.f32 %v1507, %v1514
          %v1531 = vadd.f32 %v1508, %v1514
          %v1532 = vmul.f32 %v1415, %v1516
          %v1533 = vmul.f32 %v1420, %v1517
          %v1534 = vmul.f32 %v1425, %v1518
          %v1535 = vmul.f32 %v1430, %v1519
          %v1536 = vmul.f32 %v1435, %v1520
          %v1537 = vmul.f32 %v1440, %v1521
          %v1538 = vmul.f32 %v1445, %v1522
          %v1539 = vmul.f32 %v1450, %v1523
          %v1540 = vmul.f32 %v1455, %v1524
          %v1541 = vmul.f32 %v1460, %v1525
          %v1542 = vmul.f32 %v1465, %v1526
          %v1543 = vmul.f32 %v1470, %v1527
          %v1544 = vmul.f32 %v1475, %v1528
          %v1545 = vmul.f32 %v1480, %v1529
          %v1546 = vmul.f32 %v1485, %v1530
          %v1547 = vmul.f32 %v1490, %v1531
          %v1548 = vsel %vm1256, %v1532, 0.0
          %1549 = vadd.xlane.f32.xlu0 %v1548
          %v1550 = vpop.xlane.xlu0 %1549
          %v1551 = vsel %vm1256, %v1533, 0.0
          %1552 = vadd.xlane.f32.xlu0 %v1551
          %v1553 = vpop.xlane.xlu0 %1552
          %v1554 = vsel %vm1256, %v1534, 0.0
          %1555 = vadd.xlane.f32.xlu0 %v1554
          %v1556 = vpop.xlane.xlu0 %1555
          %v1557 = vsel %vm1256, %v1535, 0.0
          %1558 = vadd.xlane.f32.xlu0 %v1557
          %v1559 = vpop.xlane.xlu0 %1558
          %v1560 = vsel %vm1256, %v1536, 0.0
          %1561 = vadd.xlane.f32.xlu0 %v1560
          %v1562 = vpop.xlane.xlu0 %1561
          %v1563 = vsel %vm1256, %v1537, 0.0
          %1564 = vadd.xlane.f32.xlu0 %v1563
          %v1565 = vpop.xlane.xlu0 %1564
          %v1566 = vsel %vm1256, %v1538, 0.0
          %1567 = vadd.xlane.f32.xlu0 %v1566
          %v1568 = vpop.xlane.xlu0 %1567
          %v1569 = vsel %vm1256, %v1539, 0.0
          %1570 = vadd.xlane.f32.xlu0 %v1569
          %v1571 = vpop.xlane.xlu0 %1570
          %v1572 = vsel %vm1256, %v1540, 0.0
          %1573 = vadd.xlane.f32.xlu0 %v1572
          %v1574 = vpop.xlane.xlu0 %1573
          %v1575 = vsel %vm1256, %v1541, 0.0
          %1576 = vadd.xlane.f32.xlu0 %v1575
          %v1577 = vpop.xlane.xlu0 %1576
          %v1578 = vsel %vm1256, %v1542, 0.0
          %1579 = vadd.xlane.f32.xlu0 %v1578
          %v1580 = vpop.xlane.xlu0 %1579
          %v1581 = vsel %vm1256, %v1543, 0.0
          %1582 = vadd.xlane.f32.xlu0 %v1581
          %v1583 = vpop.xlane.xlu0 %1582
          %v1584 = vsel %vm1256, %v1544, 0.0
          %1585 = vadd.xlane.f32.xlu0 %v1584
          %v1586 = vpop.xlane.xlu0 %1585
          %v1587 = vsel %vm1256, %v1545, 0.0
          %1588 = vadd.xlane.f32.xlu0 %v1587
          %v1589 = vpop.xlane.xlu0 %1588
          %v1590 = vsel %vm1256, %v1546, 0.0
          %1591 = vadd.xlane.f32.xlu0 %v1590
          %v1592 = vpop.xlane.xlu0 %1591
          %v1593 = vsel %vm1256, %v1547, 0.0
          %1594 = vadd.xlane.f32.xlu0 %v1593
          %v1595 = vpop.xlane.xlu0 %1594
          %v1612 = vlaneseq
          %v1613 = vand.u32 %v1612, 127
          %v1614 = vlaneseq
          %v1615 = vshrl.u32 %v1614, 7
          %v1616 = vsub.s32 %v1613, %v1615
          %v1617 = vrot.slane %v1550, %v1616
          %v1618 = vadd.s32 %v1613, 4294967288
          %v1619 = vlaneseq
          %v1620 = vshrl.u32 %v1619, 7
          %v1621 = vsub.s32 %v1618, %v1620
          %v1622 = vrot.slane %v1553, %v1621
          %vm1623 = vcmask 130112
          %v1624 = vsel %vm1623, %v1622, %v1617
          %v1625 = vadd.s32 %v1613, 4294967280
          %v1626 = vlaneseq
          %v1627 = vshrl.u32 %v1626, 7
          %v1628 = vsub.s32 %v1625, %v1627
          %v1629 = vrot.slane %v1556, %v1628
          %vm1630 = vcmask 195712
          %v1631 = vsel %vm1630, %v1629, %v1624
          %v1632 = vadd.s32 %v1613, 4294967272
          %v1633 = vlaneseq
          %v1634 = vshrl.u32 %v1633, 7
          %v1635 = vsub.s32 %v1632, %v1634
          %v1636 = vrot.slane %v1559, %v1635
          %vm1637 = vcmask 261312
          %v1638 = vsel %vm1637, %v1636, %v1631
          %v1639 = vadd.s32 %v1613, 4294967264
          %v1640 = vlaneseq
          %v1641 = vshrl.u32 %v1640, 7
          %v1642 = vsub.s32 %v1639, %v1641
          %v1643 = vrot.slane %v1562, %v1642
          %vm1644 = vcmask 326912
          %v1645 = vsel %vm1644, %v1643, %v1638
          %v1646 = vadd.s32 %v1613, 4294967256
          %v1647 = vlaneseq
          %v1648 = vshrl.u32 %v1647, 7
          %v1649 = vsub.s32 %v1646, %v1648
          %v1650 = vrot.slane %v1565, %v1649
          %vm1651 = vcmask 392512
          %v1652 = vsel %vm1651, %v1650, %v1645
          %v1653 = vadd.s32 %v1613, 4294967248
          %v1654 = vlaneseq
          %v1655 = vshrl.u32 %v1654, 7
          %v1656 = vsub.s32 %v1653, %v1655
          %v1657 = vrot.slane %v1568, %v1656
          %vm1658 = vcmask 458112
          %v1659 = vsel %vm1658, %v1657, %v1652
          %v1660 = vadd.s32 %v1613, 4294967240
          %v1661 = vlaneseq
          %v1662 = vshrl.u32 %v1661, 7
          %v1663 = vsub.s32 %v1660, %v1662
          %v1664 = vrot.slane %v1571, %v1663
          %vm1665 = vcmask 523712
          %v1666 = vsel %vm1665, %v1664, %v1659
          %v1667 = vadd.s32 %v1613, 4294967232
          %v1668 = vlaneseq
          %v1669 = vshrl.u32 %v1668, 7
          %v1670 = vsub.s32 %v1667, %v1669
          %v1671 = vrot.slane %v1574, %v1670
          %vm1672 = vcmask 589312
          %v1673 = vsel %vm1672, %v1671, %v1666
          %v1674 = vadd.s32 %v1613, 4294967224
          %v1675 = vlaneseq
          %v1676 = vshrl.u32 %v1675, 7
          %v1677 = vsub.s32 %v1674, %v1676
          %v1678 = vrot.slane %v1577, %v1677
          %vm1679 = vcmask 654912
          %v1680 = vsel %vm1679, %v1678, %v1673
          %v1681 = vadd.s32 %v1613, 4294967216
          %v1682 = vlaneseq
          %v1683 = vshrl.u32 %v1682, 7
          %v1684 = vsub.s32 %v1681, %v1683
          %v1685 = vrot.slane %v1580, %v1684
          %vm1686 = vcmask 720512
          %v1687 = vsel %vm1686, %v1685, %v1680
          %v1688 = vadd.s32 %v1613, 4294967208
          %v1689 = vlaneseq
          %v1690 = vshrl.u32 %v1689, 7
          %v1691 = vsub.s32 %v1688, %v1690
          %v1692 = vrot.slane %v1583, %v1691
          %vm1693 = vcmask 786112
          %v1694 = vsel %vm1693, %v1692, %v1687
          %v1695 = vadd.s32 %v1613, 4294967200
          %v1696 = vlaneseq
          %v1697 = vshrl.u32 %v1696, 7
          %v1698 = vsub.s32 %v1695, %v1697
          %v1699 = vrot.slane %v1586, %v1698
          %vm1700 = vcmask 851712
          %v1701 = vsel %vm1700, %v1699, %v1694
          %v1702 = vadd.s32 %v1613, 4294967192
          %v1703 = vlaneseq
          %v1704 = vshrl.u32 %v1703, 7
          %v1705 = vsub.s32 %v1702, %v1704
          %v1706 = vrot.slane %v1589, %v1705
          %vm1707 = vcmask 917312
          %v1708 = vsel %vm1707, %v1706, %v1701
          %v1709 = vadd.s32 %v1613, 4294967184
          %v1710 = vlaneseq
          %v1711 = vshrl.u32 %v1710, 7
          %v1712 = vsub.s32 %v1709, %v1711
          %v1713 = vrot.slane %v1592, %v1712
          %vm1714 = vcmask 982912
          %v1715 = vsel %vm1714, %v1713, %v1708
          %v1716 = vadd.s32 %v1613, 4294967176
          %v1717 = vlaneseq
          %v1718 = vshrl.u32 %v1717, 7
          %v1719 = vsub.s32 %v1716, %v1718
          %v1720 = vrot.slane %v1595, %v1719
          %vm1721 = vcmask 1048512
          %v1722 = vsel %vm1721, %v1720, %v1715
          %1724 = vst [vmem:[%s452] sm:$0x1] %v1722
        $region94: #{tpu_custom_call.1} parent=81 // pred_fallthru
          _
        %s1725 = sand.u32 %s210, 1
        %s1726 = scalar_lea.sflag [#allocation5], %s1725
        %s1727 = sand.u32 %s210, 1
        %s1728 = scalar_lea.vmem [#allocation4], %s1727
        %s1729 = sand.u32 %s236, 1
        %s1730 = scalar_lea.sflag [#allocation7], %s1729
        %s1731 = sand.u32 %s236, 1
        %s1732 = smul.addr %s1731, 256
        %s1733 = scalar_lea.vmem [#allocation6], %s1732
        // Predicated region
        $region95: #{tpu_custom_call.1} parent=81 // pred_check
          %p1734 = pneg %p220
        $region96: #{tpu_custom_call.1} parent=81 // pred_check_branch
          %1736 = sbr.rel (%p1734) target = $region98
        $region97: #{tpu_custom_call.1} parent=81 // pred_region
          %s1738 = ssub.s32 16, 16
          %1739 = vsyncadd %s1726, %s1738
          %s1740 = smul.addr %s30, 16
          %s1741 = scalar_lea.hbm %s7, %s1740
          %s1743 = sshll.u32 %s1728, 4
          %s1744 = int_to_ptr.vmem [resolvable:$true] %s1743
          %1746 = dma.vmem_to_hbm [thread:$0]  %s1744, 16, %s1741, %s1726
        $region98: #{tpu_custom_call.1} parent=81 // pred_fallthru
          _
        // Predicated region
        $region99: #{tpu_custom_call.1} parent=81 // pred_check
          %p1747 = pneg %p246
        $region100: #{tpu_custom_call.1} parent=81 // pred_check_branch
          %1749 = sbr.rel (%p1747) target = $region102
        $region101: #{tpu_custom_call.1} parent=81 // pred_region
          %s1750 = smul.u32 16, %s30
          %s1752 = ssub.s32 4096, 4096
          %1753 = vsyncadd %s1730, %s1752
          %s1754 = smul.addr %s1750, 2
          %s1755 = smul.addr %s1754, 128
          %s1756 = scalar_lea.hbm %s8, %s1755
          %s1757 = sshll.u32 %s1733, 4
          %s1758 = int_to_ptr.vmem [resolvable:$true] %s1757
          %1763 = dma.vmem_to_hbm [thread:$0]  %s1758, 4096, %s1756, %s1730, 256, 256, 16
        $region102: #{tpu_custom_call.1} parent=81 // pred_fallthru
          _
      $region82: #{tpu_custom_call.1} parent=5 // pred_fallthru
        _
      %p1764 = scmp.le.s32.totalorder 2, %s21
      // Predicated region
      $region103: #{tpu_custom_call.1} parent=5 // pred_check
        %p1765 = pneg %p1764
      $region104: #{tpu_custom_call.1} parent=5 // pred_check_branch
        %1767 = sbr.rel (%p1765) target = $region106
      $region105: #{tpu_custom_call.1} parent=5 // pred_region
        %s1768 = ssub.s32 %s21, 2
        // Predicated region
        $region107: #{tpu_custom_call.1} parent=105 // pred_check
          %p1769 = pneg %p226
        $region108: #{tpu_custom_call.1} parent=105 // pred_check_branch
          %1771 = sbr.rel (%p1769) target = $region110
        $region109: #{tpu_custom_call.1} parent=105 // pred_region
          %s1772 = sand.u32 %s211, 1
          %s1773 = scalar_lea.sflag [#allocation5], %s1772
          %s1774 = sand.u32 %s211, 1
          %s1775 = scalar_lea.vmem [#allocation4], %s1774
          %1776 = dma.done %s1773, 16
        $region110: #{tpu_custom_call.1} parent=105 // pred_fallthru
          _
        // Predicated region
        $region111: #{tpu_custom_call.1} parent=105 // pred_check
          %p1777 = pneg %p252
        $region112: #{tpu_custom_call.1} parent=105 // pred_check_branch
          %1779 = sbr.rel (%p1777) target = $region114
        $region113: #{tpu_custom_call.1} parent=105 // pred_region
          %s1780 = sand.u32 %s237, 1
          %s1781 = scalar_lea.sflag [#allocation7], %s1780
          %s1782 = sand.u32 %s237, 1
          %s1783 = smul.addr %s1782, 256
          %s1784 = scalar_lea.vmem [#allocation6], %s1783
          %1785 = dma.done %s1781, 4096
        $region114: #{tpu_custom_call.1} parent=105 // pred_fallthru
          _
      $region106: #{tpu_custom_call.1} parent=5 // pred_fallthru
        _
    $region6: #{tpu_custom_call.1} parent=1 // loop_footer
      %s25 = sadd.s32 1, %s21
    $region7: #{tpu_custom_call.1} parent=1 // loop_footer_branch
      %20 = sbr.rel target = $region3
    $region8: #{tpu_custom_call.1} parent=1 // loop_exit
      _
    %1786 = vsyncpa [#allocation5], 1
    %s1787 = scalar_lea.sflag [#allocation5], 1
    %1788 = vsyncpa %s1787, 1
    %1789 = vsyncpa [#allocation7], 1
    %s1790 = scalar_lea.sflag [#allocation7], 1
    %1791 = vsyncpa %s1790, 1

</llo_original>
